<compile_context>
chip_gen: v7x
topology: tpu7x:2x2x1
jax: 0.10.0
libtpu: 0.0.40
codegen_flags: <defaults>
</compile_context>

<pallas_src>
import jax
import jax.numpy as jnp
from jax.experimental import pallas as pl
from jax.experimental.pallas import tpu as pltpu

N_OUT_PAD = 128  # lane-dense padded width for the 3 packed heads


def simplefc_kernel(x_ref, w1_ref, b1_ref, wh_ref, bh_ref, out_ref, acc_ref):
    k = pl.program_id(1)

    @pl.when(k == 0)
    def _init():
        acc_ref[...] = jnp.zeros_like(acc_ref)

    # fc1 partial product: (tm, tk) bf16 @ (tk, d_inner) bf16 -> f32 accumulate.
    acc_ref[...] += jnp.dot(x_ref[...], w1_ref[...],
                            preferred_element_type=jnp.float32)

    @pl.when(k == pl.num_programs(1) - 1)
    def _finalize():
        # bias + ReLU epilogue in f32 (friendly to v5e: no bf16 VPU math).
        h = jnp.maximum(acc_ref[...] + b1_ref[...], 0.0)
        # TODO(synk): dropout is identity here (eval mode); training-mode dropout
        # would use pltpu.prng_seed / pltpu.stateful_bernoulli.
        # Packed + padded heads: bf16 operands on the MXU, f32 accumulation,
        # lane-dense (tm, 128) store.
        out = jnp.dot(h.astype(jnp.bfloat16), wh_ref[...],
                      preferred_element_type=jnp.float32)
        out_ref[...] = (out + bh_ref[...]).astype(out_ref.dtype)


def prepare_params(w1, b1, wh, bh):
    """One-time weight-side transforms, hoisted out of the forward path."""
    d_inner = w1.shape[1]
    w1_bf = w1.astype(jnp.bfloat16)                                  # (F_in, d_inner)
    b1_2d = b1.reshape(1, -1).astype(jnp.float32)                    # (1, d_inner)
    wh_pad = jnp.zeros((d_inner, N_OUT_PAD), jnp.bfloat16).at[:, :3].set(
        wh.astype(jnp.bfloat16))                                     # (d_inner, 128)
    bh_pad = jnp.zeros((1, N_OUT_PAD), jnp.float32).at[0, :3].set(bh)
    return w1_bf, b1_2d, wh_pad, bh_pad


def _choose_tk(f_in, d_inner, target_bytes=4 << 20):
    """Largest K tile that divides F_in, is a multiple of 128, and keeps the
    bf16 w1 tile around ~4 MiB (sized against v7x's 64 MiB physical VMEM)."""
    if f_in % 128 != 0:
        return f_in  # single K step; block equals full array dim (allowed)
    target = max(128, target_bytes // (d_inner * 2))
    best = 128
    k = 128
    while k <= f_in:
        if f_in % k == 0 and k <= target:
            best = k
        k += 128
    return best


def _vmem_limit_bytes(tm, tk, d_inner):
    x_b = 2 * tm * tk * 2              # bf16 x tile, double-buffered
    w1_b = 2 * tk * d_inner * 2        # bf16 w1 tile, double-buffered
    b1_b = d_inner * 4                 # invariant (single buffer)
    wh_b = d_inner * N_OUT_PAD * 2     # invariant bf16 packed heads
    bh_b = N_OUT_PAD * 4
    out_b = 2 * tm * N_OUT_PAD * 2     # bf16 output tile, double-buffered
    acc_b = tm * d_inner * 4           # f32 accumulator scratch
    total = x_b + w1_b + b1_b + wh_b + bh_b + out_b + acc_b
    # 2x headroom for compiler-internal scratch; clamp to [16 MiB, 48 MiB].
    return int(min(max(2 * total + (4 << 20), 16 << 20), 48 << 20))


def _run_kernel(args, *, B, tm, tk, num_m, num_k, d_inner,
                single_buffer_invariants):
    # Grid-invariant operands (constant index_map) get single buffering so they
    # are not pointlessly double-buffered; x / w1 stream per grid step and stay
    # double-buffered for DMA/compute overlap.
    inv = ({"pipeline_mode": pl.Buffered(1)} if single_buffer_invariants else {})
    return pl.pallas_call(
        simplefc_kernel,
        out_shape=jax.ShapeDtypeStruct((B, N_OUT_PAD), jnp.bfloat16),
        grid=(num_m, num_k),
        in_specs=[
            pl.BlockSpec((tm, tk), lambda i, k: (i, k)),                   # x tile
            pl.BlockSpec((tk, d_inner), lambda i, k: (k, 0)),              # w1 K tile
            pl.BlockSpec((1, d_inner), lambda i, k: (0, 0), **inv),        # b1
            pl.BlockSpec((d_inner, N_OUT_PAD), lambda i, k: (0, 0), **inv),  # heads
            pl.BlockSpec((1, N_OUT_PAD), lambda i, k: (0, 0), **inv),      # head bias
        ],
        out_specs=pl.BlockSpec((tm, N_OUT_PAD), lambda i, k: (i, 0)),
        scratch_shapes=[pltpu.VMEM((tm, d_inner), jnp.float32)],
        compiler_params=pltpu.CompilerParams(
            dimension_semantics=("parallel", "arbitrary"),
            vmem_limit_bytes=_vmem_limit_bytes(tm, tk, d_inner)),
    )(*args)


def simple_fc_forward(x, params, *, tile_m=256, tk=None):
    """x: (B, S, D) float32. params from prepare_params. Returns (h1, h2, h3)."""
    w1_bf, b1_2d, wh_pad, bh_pad = params
    B = x.shape[0]
    x_flat = x.reshape(B, -1)                 # row-major == torch .view
    f_in = x_flat.shape[1]
    d_inner = w1_bf.shape[1]
    assert w1_bf.shape[0] == f_in

    # M tile: small batches -> one sublane-aligned tile; large batches -> tile_m
    # (256 keeps the 256-wide v6e/v7x MXU full; pass tile_m=128 on v5e).
    if B <= tile_m:
        tm = max(8, ((B + 7) // 8) * 8)
    else:
        tm = tile_m

    if tk is None:
        tk = _choose_tk(f_in, d_inner)
    assert f_in % tk == 0, "K tile must divide F_in"

    num_m = pl.cdiv(B, tm)   # ragged last M block handled by Pallas (no jnp.pad)
    num_k = f_in // tk

    # bf16 activations for the MXU (f32 accumulation inside the kernel).
    x_bf = x_flat.astype(jnp.bfloat16)
    args = (x_bf, w1_bf, b1_2d, wh_pad, bh_pad)
    kw = dict(B=B, tm=tm, tk=tk, num_m=num_m, num_k=num_k, d_inner=d_inner)
    try:
        out = _run_kernel(args, single_buffer_invariants=True, **kw)
    except Exception:
        # Fallback if this JAX build rejects Buffered(1); semantics identical.
        out = _run_kernel(args, single_buffer_invariants=False, **kw)

    out = out[:, :3].astype(jnp.float32)
    return out[:, 0:1], out[:, 1:2], out[:, 2:3]


def init_params(key, n_max_seq, d_model, d_inner):
    """Deterministic init matching nn.Linear shapes (uniform +/- 1/sqrt(fan_in))."""
    f_in = n_max_seq * d_model
    k1, k2, k3, k4, k5, k6, k7, k8 = jax.random.split(key, 8)
    lim1 = 1.0 / jnp.sqrt(f_in)
    w1 = jax.random.uniform(k1, (f_in, d_inner), jnp.float32, -lim1, lim1)
    b1 = jax.random.uniform(k2, (d_inner,), jnp.float32, -lim1, lim1)
    lim2 = 1.0 / jnp.sqrt(d_inner)
    wh1 = jax.random.uniform(k3, (d_inner, 1), jnp.float32, -lim2, lim2)
    bh1 = jax.random.uniform(k4, (1,), jnp.float32, -lim2, lim2)
    wh2 = jax.random.uniform(k5, (d_inner, 1), jnp.float32, -lim2, lim2)
    bh2 = jax.random.uniform(k6, (1,), jnp.float32, -lim2, lim2)
    wh3 = jax.random.uniform(k7, (d_inner, 1), jnp.float32, -lim2, lim2)
    bh3 = jax.random.uniform(k8, (1,), jnp.float32, -lim2, lim2)
    wh = jnp.concatenate([wh1, wh2, wh3], axis=1)   # (d_inner, 3)
    bh = jnp.concatenate([bh1, bh2, bh3], axis=0)   # (3,)
    return w1, b1, wh, bh


if __name__ == "__main__":
    # Small shapes consistent with the module: opt.n_max_seq=8, opt.d_model=32,
    # opt.d_inner=128, batch=2.
    B, S, D, d_inner = 2, 8, 32, 128
    key = jax.random.PRNGKey(0)
    kx, kp = jax.random.split(key)
    x = jax.random.normal(kx, (B, S, D), dtype=jnp.float32)
    w1, b1, wh, bh = init_params(kp, S, D, d_inner)

    params = prepare_params(w1, b1, wh, bh)     # one-time weight packing / cast
    # tk=128 exercises the K-tiled accumulator path (F_in=256 -> 2 K steps).
    h1, h2, h3 = simple_fc_forward(x, params, tk=128)
    jax.block_until_ready((h1, h2, h3))

    # Reference check in plain JAX f32; bf16 fc1/head operands -> looser tolerance.
    xf = x.reshape(B, -1)
    hid = jnp.maximum(xf @ w1 + b1, 0.0)
    ref = hid @ wh + bh
    got = jnp.concatenate([h1, h2, h3], axis=1)
    assert h1.shape == (B, 1) and h2.shape == (B, 1) and h3.shape == (B, 1)
    assert jnp.allclose(got, ref, atol=5e-2, rtol=5e-2), (got, ref)

    print("KERNEL_OK")
</pallas_src>

<mosaic_0001>
module attributes {stable_mosaic.version = 11 : i64} {
  func.func @simplefc_kernel(%arg0: i32, %arg1: i32, %arg2: memref<8x128xbf16, #tpu.memory_space<vmem>>, %arg3: memref<128x128xbf16, #tpu.memory_space<vmem>>, %arg4: memref<1x128xf32, #tpu.memory_space<vmem>>, %arg5: memref<128x128xbf16, #tpu.memory_space<vmem>>, %arg6: memref<1x128xf32, #tpu.memory_space<vmem>>, %arg7: memref<8x128xbf16, #tpu.memory_space<vmem>>, %arg8: memref<8x128xf32, #tpu.memory_space<vmem>>) attributes {dimension_semantics = [#tpu.dimension_semantics<parallel>, #tpu.dimension_semantics<arbitrary>], iteration_bounds = array<i64: 1, 2>, scalar_prefetch = 0 : i64, scratch_operands = 1 : i64, tpu.core_type = #tpu.core_type<tc>, window_params = [{transform_indices = @transform_0, window_bounds = array<i64: 8, 128>}, {transform_indices = @transform_1, window_bounds = array<i64: 128, 128>}, {pipeline_mode = #tpu.pipeline_mode<synchronous>, transform_indices = @transform_2, window_bounds = array<i64: 1, 128>}, {pipeline_mode = #tpu.pipeline_mode<synchronous>, transform_indices = @transform_3, window_bounds = array<i64: 128, 128>}, {pipeline_mode = #tpu.pipeline_mode<synchronous>, transform_indices = @transform_4, window_bounds = array<i64: 1, 128>}, {transform_indices = @transform_5, window_bounds = array<i64: 8, 128>}]} {
    %c0_i32 = arith.constant 0 : i32
    %0 = arith.cmpi eq, %arg1, %c0_i32 : i32
    %1 = arith.extui %0 : i1 to i32
    %c0_i32_0 = arith.constant 0 : i32
    %2 = arith.cmpi ne, %1, %c0_i32_0 : i32
    scf.if %2 {
      %cst_9 = arith.constant 0.000000e+00 : f32
      %12 = vector.broadcast %cst_9 : f32 to vector<8x128xf32>
      %c0_10 = arith.constant 0 : index
      %c0_11 = arith.constant 0 : index
      %13 = vector.load %arg8[%c0_10, %c0_11] : memref<8x128xf32, #tpu.memory_space<vmem>>, vector<8x128xf32>
      tpu.vector_store %arg8[%c0_10, %c0_11], %12 {strides = array<i32>} : memref<8x128xf32, #tpu.memory_space<vmem>>, vector<8x128xf32>,
    } else {
    }
    %c0 = arith.constant 0 : index
    %c0_1 = arith.constant 0 : index
    %3 = vector.load %arg8[%c0, %c0_1] : memref<8x128xf32, #tpu.memory_space<vmem>>, vector<8x128xf32>
    %c0_2 = arith.constant 0 : index
    %c0_3 = arith.constant 0 : index
    %4 = vector.load %arg2[%c0_2, %c0_3] : memref<8x128xbf16, #tpu.memory_space<vmem>>, vector<8x128xbf16>
    %c0_4 = arith.constant 0 : index
    %c0_5 = arith.constant 0 : index
    %5 = vector.load %arg3[%c0_4, %c0_5] : memref<128x128xbf16, #tpu.memory_space<vmem>>, vector<128x128xbf16>
    %cst = arith.constant dense<0.000000e+00> : vector<8x128xf32>
    %6 = tpu.matmul %4, %5, %cst {dimension_numbers = #tpu.dot_dimension_numbers<[1], [0], [0], [1], [0, 0, 1, 1], [], []>} : vector<8x128xbf16>, vector<128x128xbf16>, vector<8x128xf32> -> vector<8x128xf32>
    %7 = arith.addf %3, %6 : vector<8x128xf32>
    %c0_6 = arith.constant 0 : index
    %c0_7 = arith.constant 0 : index
    %8 = vector.load %arg8[%c0_6, %c0_7] : memref<8x128xf32, #tpu.memory_space<vmem>>, vector<8x128xf32>
    tpu.vector_store %arg8[%c0_6, %c0_7], %7 {strides = array<i32>} : memref<8x128xf32, #tpu.memory_space<vmem>>, vector<8x128xf32>,
    %c1_i32 = arith.constant 1 : i32
    %9 = arith.cmpi eq, %arg1, %c1_i32 : i32
    %10 = arith.extui %9 : i1 to i32
    %c0_i32_8 = arith.constant 0 : i32
    %11 = arith.cmpi ne, %10, %c0_i32_8 : i32
    scf.if %11 {
      %c0_9 = arith.constant 0 : index
      %c0_10 = arith.constant 0 : index
      %12 = vector.load %arg8[%c0_9, %c0_10] : memref<8x128xf32, #tpu.memory_space<vmem>>, vector<8x128xf32>
      %c0_11 = arith.constant 0 : index
      %c0_12 = arith.constant 0 : index
      %13 = vector.load %arg4[%c0_11, %c0_12] : memref<1x128xf32, #tpu.memory_space<vmem>>, vector<1x128xf32>
      %14 = vector.broadcast %13 : vector<1x128xf32> to vector<8x128xf32>
      %15 = arith.addf %12, %14 : vector<8x128xf32>
      %cst_13 = arith.constant 0.000000e+00 : f32
      %16 = vector.broadcast %cst_13 : f32 to vector<8x128xf32>
      %17 = arith.maximumf %15, %16 : vector<8x128xf32>
      %18 = arith.truncf %17 : vector<8x128xf32> to vector<8x128xbf16>
      %c0_14 = arith.constant 0 : index
      %c0_15 = arith.constant 0 : index
      %19 = vector.load %arg5[%c0_14, %c0_15] : memref<128x128xbf16, #tpu.memory_space<vmem>>, vector<128x128xbf16>
      %cst_16 = arith.constant dense<0.000000e+00> : vector<8x128xf32>
      %20 = tpu.matmul %18, %19, %cst_16 {dimension_numbers = #tpu.dot_dimension_numbers<[1], [0], [0], [1], [0, 0, 1, 1], [], []>} : vector<8x128xbf16>, vector<128x128xbf16>, vector<8x128xf32> -> vector<8x128xf32>
      %c0_17 = arith.constant 0 : index
      %c0_18 = arith.constant 0 : index
      %21 = vector.load %arg6[%c0_17, %c0_18] : memref<1x128xf32, #tpu.memory_space<vmem>>, vector<1x128xf32>
      %22 = vector.broadcast %21 : vector<1x128xf32> to vector<8x128xf32>
      %23 = arith.addf %20, %22 : vector<8x128xf32>
      %24 = arith.truncf %23 : vector<8x128xf32> to vector<8x128xbf16>
      %c0_19 = arith.constant 0 : index
      %c0_20 = arith.constant 0 : index
      %25 = vector.load %arg7[%c0_19, %c0_20] : memref<8x128xbf16, #tpu.memory_space<vmem>>, vector<8x128xbf16>
      tpu.vector_store %arg7[%c0_19, %c0_20], %24 {strides = array<i32>} : memref<8x128xbf16, #tpu.memory_space<vmem>>, vector<8x128xbf16>,
    } else {
    }
    return
  }
  func.func @transform_0(%arg0: i32, %arg1: i32) -> (i32, i32) {
    %c0_i32 = arith.constant 0 : i32
    return %arg0, %arg1 : i32, i32
  }
  func.func @transform_1(%arg0: i32, %arg1: i32) -> (i32, i32) {
    %c0_i32 = arith.constant 0 : i32
    %c0_i32_0 = arith.constant 0 : i32
    return %arg1, %c0_i32 : i32, i32
  }
  func.func @transform_2(%arg0: i32, %arg1: i32) -> (i32, i32) {
    %c0_i32 = arith.constant 0 : i32
    %c0_i32_0 = arith.constant 0 : i32
    %c0_i32_1 = arith.constant 0 : i32
    return %c0_i32, %c0_i32_0 : i32, i32
  }
  func.func @transform_3(%arg0: i32, %arg1: i32) -> (i32, i32) {
    %c0_i32 = arith.constant 0 : i32
    %c0_i32_0 = arith.constant 0 : i32
    %c0_i32_1 = arith.constant 0 : i32
    return %c0_i32, %c0_i32_0 : i32, i32
  }
  func.func @transform_4(%arg0: i32, %arg1: i32) -> (i32, i32) {
    %c0_i32 = arith.constant 0 : i32
    %c0_i32_0 = arith.constant 0 : i32
    %c0_i32_1 = arith.constant 0 : i32
    return %c0_i32, %c0_i32_0 : i32, i32
  }
  func.func @transform_5(%arg0: i32, %arg1: i32) -> (i32, i32) {
    %c0_i32 = arith.constant 0 : i32
    %c0_i32_0 = arith.constant 0 : i32
    return %arg0, %c0_i32 : i32, i32
  }
}

module attributes {stable_mosaic.version = 11 : i64} {
  func.func @simplefc_kernel(%arg0: i32, %arg1: i32, %arg2: memref<8x128xbf16, #tpu.memory_space<vmem>>, %arg3: memref<128x128xbf16, #tpu.memory_space<vmem>>, %arg4: memref<1x128xf32, #tpu.memory_space<vmem>>, %arg5: memref<128x128xbf16, #tpu.memory_space<vmem>>, %arg6: memref<1x128xf32, #tpu.memory_space<vmem>>, %arg7: memref<8x128xbf16, #tpu.memory_space<vmem>>, %arg8: memref<8x128xf32, #tpu.memory_space<vmem>>) attributes {dimension_semantics = [#tpu.dimension_semantics<parallel>, #tpu.dimension_semantics<arbitrary>], iteration_bounds = array<i64: 1, 2>, scalar_prefetch = 0 : i64, scratch_operands = 1 : i64, tpu.core_type = #tpu.core_type<tc>, window_params = [{transform_indices = @transform_0, window_bounds = array<i64: 8, 128>}, {transform_indices = @transform_1, window_bounds = array<i64: 128, 128>}, {pipeline_mode = #tpu.pipeline_mode<synchronous>, transform_indices = @transform_2, window_bounds = array<i64: 1, 128>}, {pipeline_mode = #tpu.pipeline_mode<synchronous>, transform_indices = @transform_3, window_bounds = array<i64: 128, 128>}, {pipeline_mode = #tpu.pipeline_mode<synchronous>, transform_indices = @transform_4, window_bounds = array<i64: 1, 128>}, {transform_indices = @transform_5, window_bounds = array<i64: 8, 128>}]} {
    %c0_i32 = arith.constant 0 : i32
    %0 = arith.cmpi eq, %arg1, %c0_i32 : i32
    %1 = arith.extui %0 : i1 to i32
    %c0_i32_0 = arith.constant 0 : i32
    %2 = arith.cmpi ne, %1, %c0_i32_0 : i32
    scf.if %2 {
      %cst_9 = arith.constant 0.000000e+00 : f32
      %12 = vector.broadcast %cst_9 : f32 to vector<8x128xf32>
      %c0_10 = arith.constant 0 : index
      %c0_11 = arith.constant 0 : index
      %13 = vector.load %arg8[%c0_10, %c0_11] : memref<8x128xf32, #tpu.memory_space<vmem>>, vector<8x128xf32>
      tpu.vector_store %arg8[%c0_10, %c0_11], %12 {strides = array<i32>} : memref<8x128xf32, #tpu.memory_space<vmem>>, vector<8x128xf32>,
    } else {
    }
    %c0 = arith.constant 0 : index
    %c0_1 = arith.constant 0 : index
    %3 = vector.load %arg8[%c0, %c0_1] : memref<8x128xf32, #tpu.memory_space<vmem>>, vector<8x128xf32>
    %c0_2 = arith.constant 0 : index
    %c0_3 = arith.constant 0 : index
    %4 = vector.load %arg2[%c0_2, %c0_3] : memref<8x128xbf16, #tpu.memory_space<vmem>>, vector<8x128xbf16>
    %c0_4 = arith.constant 0 : index
    %c0_5 = arith.constant 0 : index
    %5 = vector.load %arg3[%c0_4, %c0_5] : memref<128x128xbf16, #tpu.memory_space<vmem>>, vector<128x128xbf16>
    %cst = arith.constant dense<0.000000e+00> : vector<8x128xf32>
    %6 = tpu.matmul %4, %5, %cst {dimension_numbers = #tpu.dot_dimension_numbers<[1], [0], [0], [1], [0, 0, 1, 1], [], []>} : vector<8x128xbf16>, vector<128x128xbf16>, vector<8x128xf32> -> vector<8x128xf32>
    %7 = arith.addf %3, %6 : vector<8x128xf32>
    %c0_6 = arith.constant 0 : index
    %c0_7 = arith.constant 0 : index
    %8 = vector.load %arg8[%c0_6, %c0_7] : memref<8x128xf32, #tpu.memory_space<vmem>>, vector<8x128xf32>
    tpu.vector_store %arg8[%c0_6, %c0_7], %7 {strides = array<i32>} : memref<8x128xf32, #tpu.memory_space<vmem>>, vector<8x128xf32>,
    %c1_i32 = arith.constant 1 : i32
    %9 = arith.cmpi eq, %arg1, %c1_i32 : i32
    %10 = arith.extui %9 : i1 to i32
    %c0_i32_8 = arith.constant 0 : i32
    %11 = arith.cmpi ne, %10, %c0_i32_8 : i32
    scf.if %11 {
      %c0_9 = arith.constant 0 : index
      %c0_10 = arith.constant 0 : index
      %12 = vector.load %arg8[%c0_9, %c0_10] : memref<8x128xf32, #tpu.memory_space<vmem>>, vector<8x128xf32>
      %c0_11 = arith.constant 0 : index
      %c0_12 = arith.constant 0 : index
      %13 = vector.load %arg4[%c0_11, %c0_12] : memref<1x128xf32, #tpu.memory_space<vmem>>, vector<1x128xf32>
      %14 = vector.broadcast %13 : vector<1x128xf32> to vector<8x128xf32>
      %15 = arith.addf %12, %14 : vector<8x128xf32>
      %cst_13 = arith.constant 0.000000e+00 : f32
      %16 = vector.broadcast %cst_13 : f32 to vector<8x128xf32>
      %17 = arith.maximumf %15, %16 : vector<8x128xf32>
      %18 = arith.truncf %17 : vector<8x128xf32> to vector<8x128xbf16>
      %c0_14 = arith.constant 0 : index
      %c0_15 = arith.constant 0 : index
      %19 = vector.load %arg5[%c0_14, %c0_15] : memref<128x128xbf16, #tpu.memory_space<vmem>>, vector<128x128xbf16>
      %cst_16 = arith.constant dense<0.000000e+00> : vector<8x128xf32>
      %20 = tpu.matmul %18, %19, %cst_16 {dimension_numbers = #tpu.dot_dimension_numbers<[1], [0], [0], [1], [0, 0, 1, 1], [], []>} : vector<8x128xbf16>, vector<128x128xbf16>, vector<8x128xf32> -> vector<8x128xf32>
      %c0_17 = arith.constant 0 : index
      %c0_18 = arith.constant 0 : index
      %21 = vector.load %arg6[%c0_17, %c0_18] : memref<1x128xf32, #tpu.memory_space<vmem>>, vector<1x128xf32>
      %22 = vector.broadcast %21 : vector<1x128xf32> to vector<8x128xf32>
      %23 = arith.addf %20, %22 : vector<8x128xf32>
      %24 = arith.truncf %23 : vector<8x128xf32> to vector<8x128xbf16>
      %c0_19 = arith.constant 0 : index
      %c0_20 = arith.constant 0 : index
      %25 = vector.load %arg7[%c0_19, %c0_20] : memref<8x128xbf16, #tpu.memory_space<vmem>>, vector<8x128xbf16>
      tpu.vector_store %arg7[%c0_19, %c0_20], %24 {strides = array<i32>} : memref<8x128xbf16, #tpu.memory_space<vmem>>, vector<8x128xbf16>,
    } else {
    }
    return
  }
  func.func @transform_0(%arg0: i32, %arg1: i32) -> (i32, i32) {
    %c0_i32 = arith.constant 0 : i32
    return %arg0, %arg1 : i32, i32
  }
  func.func @transform_1(%arg0: i32, %arg1: i32) -> (i32, i32) {
    %c0_i32 = arith.constant 0 : i32
    %c0_i32_0 = arith.constant 0 : i32
    return %arg1, %c0_i32 : i32, i32
  }
  func.func @transform_2(%arg0: i32, %arg1: i32) -> (i32, i32) {
    %c0_i32 = arith.constant 0 : i32
    %c0_i32_0 = arith.constant 0 : i32
    %c0_i32_1 = arith.constant 0 : i32
    return %c0_i32, %c0_i32_0 : i32, i32
  }
  func.func @transform_3(%arg0: i32, %arg1: i32) -> (i32, i32) {
    %c0_i32 = arith.constant 0 : i32
    %c0_i32_0 = arith.constant 0 : i32
    %c0_i32_1 = arith.constant 0 : i32
    return %c0_i32, %c0_i32_0 : i32, i32
  }
  func.func @transform_4(%arg0: i32, %arg1: i32) -> (i32, i32) {
    %c0_i32 = arith.constant 0 : i32
    %c0_i32_0 = arith.constant 0 : i32
    %c0_i32_1 = arith.constant 0 : i32
    return %c0_i32, %c0_i32_0 : i32, i32
  }
  func.func @transform_5(%arg0: i32, %arg1: i32) -> (i32, i32) {
    %c0_i32 = arith.constant 0 : i32
    %c0_i32_0 = arith.constant 0 : i32
    return %arg0, %c0_i32 : i32, i32
  }
}

</mosaic_0001>

<llo_original>
// kernel: tpu_custom_call.1
$region0: #{tpu_custom_call.1}
  #allocation0 [shape = 'u32[]', space=smem, size = 0x4, offset = 0x4, fixed_abs, tag = 'smem constant byte address 0x4 - core index']
  #allocation1 [shape = 'u32[144,128]{1,0:T(1,128)}', space=vmem, size = 0x12000, scoped, tag = 'internal scratch']
  #allocation2 [shape = 'f32[8,128]{1,0:T(8,128)}', space=vmem, size = 0x1000, scoped, tag = 'scratch operand']
  %s0 = inlined_call_operand.hbm [shape: bf16[2,256], index: 0, kind: input, shape index: {}]
  %s1 = inlined_call_operand.hbm [shape: bf16[256,128], index: 1, kind: input, shape index: {}]
  %s2 = inlined_call_operand.vmem [shape: f32[1,128], index: 2, kind: input, shape index: {}]
  %s3 = inlined_call_operand.hbm [shape: bf16[128,128], index: 3, kind: input, shape index: {}]
  %s4 = inlined_call_operand.vmem [shape: f32[1,128], index: 4, kind: input, shape index: {}]
  %s5 = inlined_call_operand.hbm [shape: bf16[2,128], index: 5, kind: output, shape index: {}]
  %s6 = sld [smem:[#allocation0]]
  $region73: #{tpu_custom_call.1} parent=0
    _
  %s8 = ssub.s32 1, %s6
  %s9 = scalar_select 0, %s8, %s6
  $region1: #{tpu_custom_call.1} parent=0
    #allocation3 [shape = 'u8[4096]{0}', space=vmem, size = 0x1000, scoped, tag = 'input window, operand 0']
    #allocation4 [shape = 's32[2]{0}', space=sflag, size = 0x8, scoped, tag = 'scoped memory for tpu_custom_call.1']
    #allocation5 [shape = 's32[2]{0}', space=sflag, size = 0x8, scoped, tag = 'scoped memory for tpu_custom_call.1']
    #allocation6 [shape = 'u8[65536]{0}', space=vmem, size = 0x10000, scoped, tag = 'input window, operand 1']
    #allocation7 [shape = 's32[2]{0}', space=sflag, size = 0x8, scoped, tag = 'scoped memory for tpu_custom_call.1']
    #allocation8 [shape = 'u8[32768]{0}', space=vmem, size = 0x8000, scoped, tag = 'input window, operand 3, single buffered']
    #allocation9 [shape = 'u8[2048]{0}', space=vmem, size = 0x800, scoped, tag = 'output window, operand 0, single buffered']
    %10 = vsyncpa [#allocation4], 0
    %s11 = scalar_lea.sflag [#allocation4], 1
    %12 = vsyncpa %s11, 0
    %13 = vsyncpa [#allocation7], 0
    %s14 = scalar_lea.sflag [#allocation7], 1
    %15 = vsyncpa %s14, 0
    %16 = vsyncpa [#allocation5], 0
    loop: start=0, step=1, limit=4
    $region2: #{tpu_custom_call.1} parent=1 // loop_pre_header
      _
    $region3: #{tpu_custom_call.1} parent=1 // loop_header
      %s18 = sphi 0, %s22
      %p19 = scmp.ge.s32.totalorder %s18, 4
      %s25 = sphi 0, %s37
      %s26 = sphi 0, %s33
      %s27 = sphi 0, %s25
      %s28 = sphi 0, %s26
      %s29 = sphi 0, %s27
      %s30 = sphi 0, %s28
      %s42 = sphi 0, %s44
      %s45 = sphi 0, %s42
      %s46 = sphi 0, %s45
      %s62 = sphi 0, %s46
      %s68 = sphi 0, %s70
      %s71 = sphi 0, %s68
      %s72 = sphi 0, %s71
      %s88 = sphi 0, %s72
      %s92 = sphi 0, %s92
      %s94 = sphi 0, %s92
      %s95 = sphi 0, %s94
      %s109 = sphi 0, %s95
      %s113 = sphi 0, %s113
      %s115 = sphi 0, %s113
      %s116 = sphi 0, %s115
      %s130 = sphi 0, %s116
      %s134 = sphi 0, %s134
      %s136 = sphi 0, %s134
      %s137 = sphi 0, %s136
      %s151 = sphi 0, %s137
      %s157 = sphi 0, %s159
      %s160 = sphi 0, %s157
      %s161 = sphi 0, %s160
      %s177 = sphi 0, %s161
    $region4: #{tpu_custom_call.1} parent=1 // loop_header_branch
      %21 = sbr.rel (%p19) target = $region8
    $region5: #{tpu_custom_call.1} parent=1 // loop_body
      %s23 = ssub.s32 %s18, 1
      %s24 = ssub.s32 %s18, 2
      %s31 = sadd.s32 1, %s26
      %p32 = scmp.ge.s32.totalorder %s31, 2
      %s33 = scalar_select %p32, 0, %s31
      %s34 = sadd.s32 1, %s25
      %s35 = scalar_select %p32, %s34, %s25
      %p36 = scmp.ge.s32.totalorder %s35, 1
      %s37 = scalar_select %p36, 0, %s35
      %s38 = ssub.s32 %s25, %s37
      %s39 = ssub.s32 %s26, %s33
      %s40 = sor.u32 %s38, %s39
      %p41 = scmp.eq.s32.totalorder %s40, 0
      %s43 = sadd.s32 %s42, 1
      %s44 = scalar_select %p41, %s42, %s43
      %p47 = pneg %p41
      %p48 = scmp.eq.s32.totalorder %s18, 1
      %p49 = por %p47, %p48
      %p50 = scmp.ne.s32.totalorder %s42, %s45
      %p51 = scmp.eq.s32.totalorder %s18, 0
      %p52 = por %p50, %p51
      %p53 = scmp.ne.s32.totalorder %s42, %s45
      %p54 = scmp.eq.s32.totalorder %s23, 1
      %p55 = por %p53, %p54
      %p56 = scmp.ne.s32.totalorder %s45, %s46
      %p57 = scmp.eq.s32.totalorder %s23, 0
      %p58 = por %p56, %p57
      %p59 = scmp.ne.s32.totalorder %s45, %s46
      %p60 = scmp.eq.s32.totalorder %s24, 1
      %p61 = por %p59, %p60
      %p63 = scmp.ne.s32.totalorder %s46, %s62
      %p64 = scmp.eq.s32.totalorder %s24, 0
      %p65 = por %p63, %p64
      %s66 = ssub.s32 %s26, %s33
      %p67 = scmp.eq.s32.totalorder %s66, 0
      %s69 = sadd.s32 %s68, 1
      %s70 = scalar_select %p67, %s68, %s69
      %p73 = pneg %p67
      %p74 = scmp.eq.s32.totalorder %s18, 1
      %p75 = por %p73, %p74
      %p76 = scmp.ne.s32.totalorder %s68, %s71
      %p77 = scmp.eq.s32.totalorder %s18, 0
      %p78 = por %p76, %p77
      %p79 = scmp.ne.s32.totalorder %s68, %s71
      %p80 = scmp.eq.s32.totalorder %s23, 1
      %p81 = por %p79, %p80
      %p82 = scmp.ne.s32.totalorder %s71, %s72
      %p83 = scmp.eq.s32.totalorder %s23, 0
      %p84 = por %p82, %p83
      %p85 = scmp.ne.s32.totalorder %s71, %s72
      %p86 = scmp.eq.s32.totalorder %s24, 1
      %p87 = por %p85, %p86
      %p89 = scmp.ne.s32.totalorder %s72, %s88
      %p90 = scmp.eq.s32.totalorder %s24, 0
      %p91 = por %p89, %p90
      %s93 = sadd.s32 %s92, 1
      %p96 = scmp.eq.s32.totalorder %s18, 1
      %p97 = scmp.ne.s32.totalorder %s92, %s94
      %p98 = scmp.eq.s32.totalorder %s18, 0
      %p99 = por %p97, %p98
      %p100 = scmp.ne.s32.totalorder %s92, %s94
      %p101 = scmp.eq.s32.totalorder %s23, 1
      %p102 = por %p100, %p101
      %p103 = scmp.ne.s32.totalorder %s94, %s95
      %p104 = scmp.eq.s32.totalorder %s23, 0
      %p105 = por %p103, %p104
      %p106 = scmp.ne.s32.totalorder %s94, %s95
      %p107 = scmp.eq.s32.totalorder %s24, 1
      %p108 = por %p106, %p107
      %p110 = scmp.ne.s32.totalorder %s95, %s109
      %p111 = scmp.eq.s32.totalorder %s24, 0
      %p112 = por %p110, %p111
      %s114 = sadd.s32 %s113, 1
      %p117 = scmp.eq.s32.totalorder %s18, 1
      %p118 = scmp.ne.s32.totalorder %s113, %s115
      %p119 = scmp.eq.s32.totalorder %s18, 0
      %p120 = por %p118, %p119
      %p121 = scmp.ne.s32.totalorder %s113, %s115
      %p122 = scmp.eq.s32.totalorder %s23, 1
      %p123 = por %p121, %p122
      %p124 = scmp.ne.s32.totalorder %s115, %s116
      %p125 = scmp.eq.s32.totalorder %s23, 0
      %p126 = por %p124, %p125
      %p127 = scmp.ne.s32.totalorder %s115, %s116
      %p128 = scmp.eq.s32.totalorder %s24, 1
      %p129 = por %p127, %p128
      %p131 = scmp.ne.s32.totalorder %s116, %s130
      %p132 = scmp.eq.s32.totalorder %s24, 0
      %p133 = por %p131, %p132
      %s135 = sadd.s32 %s134, 1
      %p138 = scmp.eq.s32.totalorder %s18, 1
      %p139 = scmp.ne.s32.totalorder %s134, %s136
      %p140 = scmp.eq.s32.totalorder %s18, 0
      %p141 = por %p139, %p140
      %p142 = scmp.ne.s32.totalorder %s134, %s136
      %p143 = scmp.eq.s32.totalorder %s23, 1
      %p144 = por %p142, %p143
      %p145 = scmp.ne.s32.totalorder %s136, %s137
      %p146 = scmp.eq.s32.totalorder %s23, 0
      %p147 = por %p145, %p146
      %p148 = scmp.ne.s32.totalorder %s136, %s137
      %p149 = scmp.eq.s32.totalorder %s24, 1
      %p150 = por %p148, %p149
      %p152 = scmp.ne.s32.totalorder %s137, %s151
      %p153 = scmp.eq.s32.totalorder %s24, 0
      %p154 = por %p152, %p153
      %s155 = ssub.s32 %s25, %s37
      %p156 = scmp.eq.s32.totalorder %s155, 0
      %s158 = sadd.s32 %s157, 1
      %s159 = scalar_select %p156, %s157, %s158
      %p162 = pneg %p156
      %p163 = scmp.eq.s32.totalorder %s18, 1
      %p164 = por %p162, %p163
      %p165 = scmp.ne.s32.totalorder %s157, %s160
      %p166 = scmp.eq.s32.totalorder %s18, 0
      %p167 = por %p165, %p166
      %p168 = scmp.ne.s32.totalorder %s157, %s160
      %p169 = scmp.eq.s32.totalorder %s23, 1
      %p170 = por %p168, %p169
      %p171 = scmp.ne.s32.totalorder %s160, %s161
      %p172 = scmp.eq.s32.totalorder %s23, 0
      %p173 = por %p171, %p172
      %p174 = scmp.ne.s32.totalorder %s160, %s161
      %p175 = scmp.eq.s32.totalorder %s24, 1
      %p176 = por %p174, %p175
      %p178 = scmp.ne.s32.totalorder %s161, %s177
      %p179 = scmp.eq.s32.totalorder %s24, 0
      %p180 = por %p178, %p179
      %p181 = scmp.le.s32.totalorder 1, %s18
      %p182 = scmp.lt.s32.totalorder %s18, 3
      %p183 = pnand %p181, %p182
      %p184 = pneg %p183
      // Predicated region
      $region9: #{tpu_custom_call.1} parent=5 // pred_check
        _
      $region10: #{tpu_custom_call.1} parent=5 // pred_check_branch
        %186 = sbr.rel (%p183) target = $region12
      $region11: #{tpu_custom_call.1} parent=5 // pred_region
        %s187 = ssub.s32 %s18, 1
        // Predicated region
        $region13: #{tpu_custom_call.1} parent=11 // pred_check
          %p188 = pneg %p105
        $region14: #{tpu_custom_call.1} parent=11 // pred_check_branch
          %190 = sbr.rel (%p188) target = $region16
        $region15: #{tpu_custom_call.1} parent=11 // pred_region
          _
        $region16: #{tpu_custom_call.1} parent=11 // pred_fallthru
          _
        // Predicated region
        $region17: #{tpu_custom_call.1} parent=11 // pred_check
          %p191 = pneg %p126
        $region18: #{tpu_custom_call.1} parent=11 // pred_check_branch
          %193 = sbr.rel (%p191) target = $region20
        $region19: #{tpu_custom_call.1} parent=11 // pred_region
          %s195 = ssub.s32 1024, 1024
          %196 = vsyncadd [#allocation7], %s195
          %s197 = sshll.u32 [#allocation8], 4
          %s198 = int_to_ptr.vmem [resolvable:$true] %s197
          %203 = dma.hbm_to_vmem [thread:$0]  %s3, 1024, %s198, [#allocation7], 64, 64, 4
        $region20: #{tpu_custom_call.1} parent=11 // pred_fallthru
          _
        // Predicated region
        $region21: #{tpu_custom_call.1} parent=11 // pred_check
          %p204 = pneg %p147
        $region22: #{tpu_custom_call.1} parent=11 // pred_check_branch
          %206 = sbr.rel (%p204) target = $region24
        $region23: #{tpu_custom_call.1} parent=11 // pred_region
          _
        $region24: #{tpu_custom_call.1} parent=11 // pred_fallthru
          _
      $region12: #{tpu_custom_call.1} parent=5 // pred_fallthru
        _
      %p207 = scmp.lt.s32.totalorder %s18, 2
      // Predicated region
      $region25: #{tpu_custom_call.1} parent=5 // pred_check
        %p208 = pneg %p207
      $region26: #{tpu_custom_call.1} parent=5 // pred_check_branch
        %210 = sbr.rel (%p208) target = $region28
      $region27: #{tpu_custom_call.1} parent=5 // pred_region
        // Predicated region
        $region29: #{tpu_custom_call.1} parent=27 // pred_check
          %p211 = pneg %p52
        $region30: #{tpu_custom_call.1} parent=27 // pred_check_branch
          %213 = sbr.rel (%p211) target = $region32
        $region31: #{tpu_custom_call.1} parent=27 // pred_region
          %s214 = sand.u32 %s42, 1
          %s215 = scalar_lea.sflag [#allocation4], %s214
          %s216 = sand.u32 %s42, 1
          %s217 = smul.addr %s216, 4
          %s218 = scalar_lea.vmem [#allocation3], %s217
          %s219 = smul.u32 4, %s25
          %s220 = ssub.s32 1, %s219
          %s221 = smul.u32 16, %s220
          %s223 = ssub.s32 64, %s221
          %224 = vsyncadd %s215, %s223
          %p225 = scmp.ne.s32.totalorder 0, %s221
          %s226 = smul.addr %s219, 2
          %s227 = sadd.s32 %s26, %s226
          %s228 = smul.addr %s227, 16
          %s229 = scalar_lea.hbm %s0, %s228
          %s230 = sshll.u32 %s218, 4
          %s231 = int_to_ptr.vmem [resolvable:$true] %s230
          %s232 = sshll.u32 %s220, 4
          %236 = dma.hbm_to_vmem [thread:$0]  (%p225), %s229, %s232, %s231, %s215, 32, 16, 1
        $region32: #{tpu_custom_call.1} parent=27 // pred_fallthru
          _
        // Predicated region
        $region33: #{tpu_custom_call.1} parent=27 // pred_check
          %p237 = pneg %p78
        $region34: #{tpu_custom_call.1} parent=27 // pred_check_branch
          %239 = sbr.rel (%p237) target = $region36
        $region35: #{tpu_custom_call.1} parent=27 // pred_region
          %s240 = sand.u32 %s18, 1
          %s241 = scalar_lea.sflag [#allocation7], %s240
          %s242 = sand.u32 %s68, 1
          %s243 = smul.addr %s242, 64
          %s244 = scalar_lea.vmem [#allocation6], %s243
          %s245 = smul.u32 16, %s26
          %s247 = ssub.s32 1024, 1024
          %248 = vsyncadd %s241, %s247
          %s249 = smul.addr %s245, 64
          %s250 = scalar_lea.hbm %s1, %s249
          %s251 = sshll.u32 %s244, 4
          %s252 = int_to_ptr.vmem [resolvable:$true] %s251
          %257 = dma.hbm_to_vmem [thread:$0]  %s250, 1024, %s252, %s241, 64, 64, 4
        $region36: #{tpu_custom_call.1} parent=27 // pred_fallthru
          _
      $region28: #{tpu_custom_call.1} parent=5 // pred_fallthru
        _
      %p258 = scmp.le.s32.totalorder 1, %s18
      %p259 = scmp.lt.s32.totalorder %s18, 3
      %p260 = pnand %p258, %p259
      %p261 = pneg %p260
      // Predicated region
      $region37: #{tpu_custom_call.1} parent=5 // pred_check
        _
      $region38: #{tpu_custom_call.1} parent=5 // pred_check_branch
        %263 = sbr.rel (%p260) target = $region40
      $region39: #{tpu_custom_call.1} parent=5 // pred_region
        %s264 = ssub.s32 %s18, 1
        %s265 = sand.u32 %s45, 1
        %s266 = scalar_lea.sflag [#allocation4], %s265
        %s267 = sand.u32 %s45, 1
        %s268 = smul.addr %s267, 4
        %s269 = scalar_lea.vmem [#allocation3], %s268
        // Predicated region
        $region41: #{tpu_custom_call.1} parent=39 // pred_check
          %p270 = pneg %p58
        $region42: #{tpu_custom_call.1} parent=39 // pred_check_branch
          %272 = sbr.rel (%p270) target = $region44
        $region43: #{tpu_custom_call.1} parent=39 // pred_region
          %273 = dma.done %s266, 64
        $region44: #{tpu_custom_call.1} parent=39 // pred_fallthru
          _
        %s274 = sand.u32 %s23, 1
        %s275 = scalar_lea.sflag [#allocation7], %s274
        %s276 = sand.u32 %s71, 1
        %s277 = smul.addr %s276, 64
        %s278 = scalar_lea.vmem [#allocation6], %s277
        // Predicated region
        $region45: #{tpu_custom_call.1} parent=39 // pred_check
          %p279 = pneg %p84
        $region46: #{tpu_custom_call.1} parent=39 // pred_check_branch
          %281 = sbr.rel (%p279) target = $region48
        $region47: #{tpu_custom_call.1} parent=39 // pred_region
          %282 = dma.done %s275, 1024
        $region48: #{tpu_custom_call.1} parent=39 // pred_fallthru
          _
        // Predicated region
        $region49: #{tpu_custom_call.1} parent=39 // pred_check
          %p283 = pneg %p126
        $region50: #{tpu_custom_call.1} parent=39 // pred_check_branch
          %285 = sbr.rel (%p283) target = $region52
        $region51: #{tpu_custom_call.1} parent=39 // pred_region
          %286 = dma.done [#allocation7], 1024
        $region52: #{tpu_custom_call.1} parent=39 // pred_fallthru
          _
        %s287 = sand.u32 %s45, 1
        %s288 = scalar_lea.sflag [#allocation4], %s287
        %s289 = sand.u32 %s45, 1
        %s290 = smul.addr %s289, 4
        %s291 = scalar_lea.vmem [#allocation3], %s290
        %p292 = pneg %p58
        %p293 = pneg %p55
        %s294 = sand.u32 %s23, 1
        %s295 = scalar_lea.sflag [#allocation7], %s294
        %s296 = sand.u32 %s71, 1
        %s297 = smul.addr %s296, 64
        %s298 = scalar_lea.vmem [#allocation6], %s297
        %p299 = pneg %p84
        %p300 = pneg %p81
        %p301 = pneg %p105
        %p302 = pneg %p102
        %p303 = pneg %p126
        %p304 = pneg %p123
        %p305 = pneg %p147
        %p306 = pneg %p144
        %p307 = pneg %p173
        %p308 = pneg %p170
        %s309 = smul.u32 4, %s27
        %s310 = ssub.s32 1, %s309
        %s311 = smul.u32 16, %s310
        %s312 = smul.u32 16, %s28
        %s313 = smul.u32 4, %s27
        %s314 = ssub.s32 1, %s313
        %s315 = smul.u32 16, %s314
        %p317 = scmp.eq.s32.totalorder %s28, 0
        // Predicated region
        $region53: #{tpu_custom_call.1} parent=39 // pred_check
          %p318 = pneg %p317
        $region54: #{tpu_custom_call.1} parent=39 // pred_check_branch
          %320 = sbr.rel (%p318) target = $region56
        $region55: #{tpu_custom_call.1} parent=39 // pred_region
          %321 = vst [vmem:[#allocation2] sm:$0xff] 0.0
        $region56: #{tpu_custom_call.1} parent=39 // pred_fallthru
          _
        %v322 = vld [vmem:[#allocation2] sm:$0xff]
        %v323 = vld [vmem:[%s269] sm:$0x1]
        %v324 = vld [vmem:[%s269 + $0x1] sm:$0x1]
        %v325 = vld [vmem:[%s269 + $0x2] sm:$0x1]
        %v326 = vld [vmem:[%s269 + $0x3] sm:$0x1]
        %v327 = vld [vmem:[%s278] sm:$0xf]
        %v328 = vld [vmem:[%s278 + $0x4] sm:$0xf]
        %v329 = vld [vmem:[%s278 + $0x8] sm:$0xf]
        %v330 = vld [vmem:[%s278 + $0xc] sm:$0xf]
        %v331 = vld [vmem:[%s278 + $0x10] sm:$0xf]
        %v332 = vld [vmem:[%s278 + $0x14] sm:$0xf]
        %v333 = vld [vmem:[%s278 + $0x18] sm:$0xf]
        %v334 = vld [vmem:[%s278 + $0x1c] sm:$0xf]
        %v335 = vld [vmem:[%s278 + $0x20] sm:$0xf]
        %v336 = vld [vmem:[%s278 + $0x24] sm:$0xf]
        %v337 = vld [vmem:[%s278 + $0x28] sm:$0xf]
        %v338 = vld [vmem:[%s278 + $0x2c] sm:$0xf]
        %v339 = vld [vmem:[%s278 + $0x30] sm:$0xf]
        %v340 = vld [vmem:[%s278 + $0x34] sm:$0xf]
        %v341 = vld [vmem:[%s278 + $0x38] sm:$0xf]
        %v342 = vld [vmem:[%s278 + $0x3c] sm:$0xf]
        %v347 = vcombine.low %v323, %v324
        %v348 = vcombine.low %v325, %v326
        %v350 = vunpack.c.l.s4 1966171168
        %v351 = vunpack.c.0.s8 %v350
        %v352 = vlaneseq
        %v353 = vshrl.u32 %v352, 7
        %v354 = vsub.s32 %v351, %v353
        %v355 = vrot.slane %v347, %v354
        %v357 = vunpack.c.l.s4 1966171168
        %v358 = vunpack.c.0.s8 %v357
        %v359 = vlaneseq
        %v360 = vshrl.u32 %v359, 7
        %v361 = vsub.s32 %v358, %v360
        %v362 = vrot.slane %v348, %v361
        %v363 = vcombine.low %v355, %v362
        %v365 = vunpack.c.l.s4 1966171168
        %v366 = vunpack.c.0.s8 %v365
        %v367 = vlaneseq
        %v368 = vshrl.u32 %v367, 7
        %v369 = vsub.s32 %v366, %v368
        %v370 = vrot.slane %v363, %v369
        %v388 = vunpack.c.l.b16 %v327
        %v389 = vunpack.c.l.b16 %v328
        %v390 = vunpack.c.l.b16 %v329
        %v391 = vunpack.c.l.b16 %v330
        %v392 = vunpack.c.l.b16 %v331
        %v393 = vunpack.c.l.b16 %v332
        %v394 = vunpack.c.l.b16 %v333
        %v395 = vunpack.c.l.b16 %v334
        %v396 = vunpack.c.l.b16 %v335
        %v397 = vunpack.c.l.b16 %v336
        %v398 = vunpack.c.l.b16 %v337
        %v399 = vunpack.c.l.b16 %v338
        %v400 = vunpack.c.l.b16 %v339
        %v401 = vunpack.c.l.b16 %v340
        %v402 = vunpack.c.l.b16 %v341
        %v403 = vunpack.c.l.b16 %v342
        %v404 = vpack.c.b16 %v389, %v388
        %v405 = vpack.c.b16 %v391, %v390
        %v406 = vpack.c.b16 %v393, %v392
        %v407 = vpack.c.b16 %v395, %v394
        %v408 = vpack.c.b16 %v397, %v396
        %v409 = vpack.c.b16 %v399, %v398
        %v410 = vpack.c.b16 %v401, %v400
        %v411 = vpack.c.b16 %v403, %v402
        %420 = vmatprep.subr.bf16.mxu0 0
        %421 = vmatpush1.bf16.msra.mxu0 %v404
        %422 = vmatprep.subr.bf16.mxu0 0
        %423 = vmatpush1.bf16.msra.mxu0 %v405
        %424 = vmatprep.subr.bf16.mxu0 0
        %425 = vmatpush1.bf16.msra.mxu0 %v406
        %426 = vmatprep.subr.bf16.mxu0 0
        %427 = vmatpush1.bf16.msra.mxu0 %v407
        %428 = vmatprep.subr.bf16.mxu0 0
        %429 = vmatpush1.bf16.msra.mxu0 %v408
        %430 = vmatprep.subr.bf16.mxu0 0
        %431 = vmatpush1.bf16.msra.mxu0 %v409
        %432 = vmatprep.subr.bf16.mxu0 0
        %433 = vmatpush1.bf16.msra.mxu0 %v410
        %434 = vmatprep.subr.bf16.mxu0 0
        %435 = vmatpush1.bf16.msra.mxu0 %v411
        %436 = vmatprep.subr.bf16.mxu0 0
        %437 = vmatpush1.bf16.msra.mxu0 0
        %438 = vmatprep.subr.bf16.mxu0 0
        %439 = vmatpush1.bf16.msra.mxu0 0
        %440 = vmatprep.subr.bf16.mxu0 0
        %441 = vmatpush1.bf16.msra.mxu0 0
        %442 = vmatprep.subr.bf16.mxu0 0
        %443 = vmatpush1.bf16.msra.mxu0 0
        %444 = vmatprep.subr.bf16.mxu0 0
        %445 = vmatpush1.bf16.msra.mxu0 0
        %446 = vmatprep.subr.bf16.mxu0 0
        %447 = vmatpush1.bf16.msra.mxu0 0
        %448 = vmatprep.subr.bf16.mxu0 0
        %449 = vmatpush1.bf16.msra.mxu0 0
        %450 = vmatprep.subr.bf16.mxu0 0
        %451 = vmatpush1.bf16.msra.mxu0 0
        %452 = vmatprep.mubr.bf16.mxu0 0
        %453 = vmatmul.mubr.bf16.gmra.mrb[0].mxu0 %v370
        %v454 = vpop.f32.mrb[0].mxu0
        %v455 = vadd.f32 0.0, %v454
        %v456 = vpop.f32.mrb[0].mxu0
        %v457 = vpop.f32.mrb[0].mxu0
        %v458 = vpop.f32.mrb[0].mxu0
        %459 = vdwg.mxu0
        %v460 = vadd.f32 %v322, %v455
        %461 = vst [vmem:[#allocation2] sm:$0xff] %v460
        %p462 = scmp.eq.s32.totalorder %s28, 1
        // Predicated region
        $region57: #{tpu_custom_call.1} parent=39 // pred_check
          %p463 = pneg %p462
        $region58: #{tpu_custom_call.1} parent=39 // pred_check_branch
          %465 = sbr.rel (%p463) target = $region60
        $region59: #{tpu_custom_call.1} parent=39 // pred_region
          %v466 = vld [vmem:[#allocation2] sm:$0xff]
          %v467 = vld [vmem:[%s2] sm:$0x1]
          %v469 = vlaneseq
          %v470 = vshrl.u32 %v469, 7
          %v471 = vsub.s32 0, %v470
          %v472 = vrot.slane %v467, %v471
          %v474 = vadd.f32 %v466, %v472
          %v475 = vmax.f32 %v474, 0.0
          %v476 = vpack.c.bf16 %v475, %v475
          %v477 = vld [vmem:[#allocation8] sm:$0xf]
          %v478 = vld [vmem:[#allocation8 + $0x4] sm:$0xf]
          %v479 = vld [vmem:[#allocation8 + $0x8] sm:$0xf]
          %v480 = vld [vmem:[#allocation8 + $0xc] sm:$0xf]
          %v481 = vld [vmem:[#allocation8 + $0x10] sm:$0xf]
          %v482 = vld [vmem:[#allocation8 + $0x14] sm:$0xf]
          %v483 = vld [vmem:[#allocation8 + $0x18] sm:$0xf]
          %v484 = vld [vmem:[#allocation8 + $0x1c] sm:$0xf]
          %v485 = vld [vmem:[#allocation8 + $0x20] sm:$0xf]
          %v486 = vld [vmem:[#allocation8 + $0x24] sm:$0xf]
          %v487 = vld [vmem:[#allocation8 + $0x28] sm:$0xf]
          %v488 = vld [vmem:[#allocation8 + $0x2c] sm:$0xf]
          %v489 = vld [vmem:[#allocation8 + $0x30] sm:$0xf]
          %v490 = vld [vmem:[#allocation8 + $0x34] sm:$0xf]
          %v491 = vld [vmem:[#allocation8 + $0x38] sm:$0xf]
          %v492 = vld [vmem:[#allocation8 + $0x3c] sm:$0xf]
          %v493 = vld [vmem:[%s4] sm:$0x1]
          %v495 = vlaneseq
          %v496 = vshrl.u32 %v495, 7
          %v497 = vsub.s32 0, %v496
          %v498 = vrot.slane %v493, %v497
          %v516 = vunpack.c.l.b16 %v477
          %v517 = vunpack.c.l.b16 %v478
          %v518 = vunpack.c.l.b16 %v479
          %v519 = vunpack.c.l.b16 %v480
          %v520 = vunpack.c.l.b16 %v481
          %v521 = vunpack.c.l.b16 %v482
          %v522 = vunpack.c.l.b16 %v483
          %v523 = vunpack.c.l.b16 %v484
          %v524 = vunpack.c.l.b16 %v485
          %v525 = vunpack.c.l.b16 %v486
          %v526 = vunpack.c.l.b16 %v487
          %v527 = vunpack.c.l.b16 %v488
          %v528 = vunpack.c.l.b16 %v489
          %v529 = vunpack.c.l.b16 %v490
          %v530 = vunpack.c.l.b16 %v491
          %v531 = vunpack.c.l.b16 %v492
          %v532 = vpack.c.b16 %v517, %v516
          %v533 = vpack.c.b16 %v519, %v518
          %v534 = vpack.c.b16 %v521, %v520
          %v535 = vpack.c.b16 %v523, %v522
          %v536 = vpack.c.b16 %v525, %v524
          %v537 = vpack.c.b16 %v527, %v526
          %v538 = vpack.c.b16 %v529, %v528
          %v539 = vpack.c.b16 %v531, %v530
          %548 = vmatprep.subr.bf16.mxu0 0
          %549 = vmatpush1.bf16.msra.mxu0 %v532
          %550 = vmatprep.subr.bf16.mxu0 0
          %551 = vmatpush1.bf16.msra.mxu0 %v533
          %552 = vmatprep.subr.bf16.mxu0 0
          %553 = vmatpush1.bf16.msra.mxu0 %v534
          %554 = vmatprep.subr.bf16.mxu0 0
          %555 = vmatpush1.bf16.msra.mxu0 %v535
          %556 = vmatprep.subr.bf16.mxu0 0
          %557 = vmatpush1.bf16.msra.mxu0 %v536
          %558 = vmatprep.subr.bf16.mxu0 0
          %559 = vmatpush1.bf16.msra.mxu0 %v537
          %560 = vmatprep.subr.bf16.mxu0 0
          %561 = vmatpush1.bf16.msra.mxu0 %v538
          %562 = vmatprep.subr.bf16.mxu0 0
          %563 = vmatpush1.bf16.msra.mxu0 %v539
          %564 = vmatprep.subr.bf16.mxu0 0
          %565 = vmatpush1.bf16.msra.mxu0 0
          %566 = vmatprep.subr.bf16.mxu0 0
          %567 = vmatpush1.bf16.msra.mxu0 0
          %568 = vmatprep.subr.bf16.mxu0 0
          %569 = vmatpush1.bf16.msra.mxu0 0
          %570 = vmatprep.subr.bf16.mxu0 0
          %571 = vmatpush1.bf16.msra.mxu0 0
          %572 = vmatprep.subr.bf16.mxu0 0
          %573 = vmatpush1.bf16.msra.mxu0 0
          %574 = vmatprep.subr.bf16.mxu0 0
          %575 = vmatpush1.bf16.msra.mxu0 0
          %576 = vmatprep.subr.bf16.mxu0 0
          %577 = vmatpush1.bf16.msra.mxu0 0
          %578 = vmatprep.subr.bf16.mxu0 0
          %579 = vmatpush1.bf16.msra.mxu0 0
          %580 = vmatprep.mubr.bf16.mxu0 0
          %581 = vmatmul.mubr.bf16.gmra.mrb[0].mxu0 %v476
          %v582 = vpop.f32.mrb[0].mxu0
          %v583 = vadd.f32 %v498, %v582
          %v584 = vpop.f32.mrb[0].mxu0
          %v585 = vpop.f32.mrb[0].mxu0
          %v586 = vpop.f32.mrb[0].mxu0
          %587 = vdwg.mxu0
          %v588 = vpack.c.bf16 %v583, %v583
          %v591 = vunpack.c.l.s4 1966171168
          %v592 = vunpack.c.0.s8 %v591
          %v593 = vlaneseq
          %v594 = vshrl.u32 %v593, 7
          %v595 = vsub.s32 %v592, %v594
          %v596 = vrot.slane %v588, %v595
          %v597 = vcombine.high %v596, %v596
          %v599 = vunpack.c.l.s4 1966171168
          %v600 = vunpack.c.0.s8 %v599
          %v601 = vlaneseq
          %v602 = vshrl.u32 %v601, 7
          %v603 = vsub.s32 %v600, %v602
          %v604 = vrot.slane %v596, %v603
          %v606 = vunpack.c.l.s4 1966171168
          %v607 = vunpack.c.0.s8 %v606
          %v608 = vlaneseq
          %v609 = vshrl.u32 %v608, 7
          %v610 = vsub.s32 %v607, %v609
          %v611 = vrot.slane %v597, %v610
          %v612 = vcombine.high %v604, %v604
          %v613 = vcombine.high %v611, %v611
          %618 = vst [vmem:[#allocation9] sm:$0x1] %v604
          %619 = vst [vmem:[#allocation9 + $0x1] sm:$0x1] %v611
          %620 = vst [vmem:[#allocation9 + $0x2] sm:$0x1] %v612
          %621 = vst [vmem:[#allocation9 + $0x3] sm:$0x1] %v613
        $region60: #{tpu_custom_call.1} parent=39 // pred_fallthru
          _
        // Predicated region
        $region61: #{tpu_custom_call.1} parent=39 // pred_check
          %p622 = pneg %p170
        $region62: #{tpu_custom_call.1} parent=39 // pred_check_branch
          %624 = sbr.rel (%p622) target = $region64
        $region63: #{tpu_custom_call.1} parent=39 // pred_region
          %s625 = smul.u32 4, %s27
          %s626 = ssub.s32 1, %s625
          %s627 = smul.u32 16, %s626
          %s629 = ssub.s32 64, %s627
          %630 = vsyncadd [#allocation5], %s629
          %p631 = scmp.ne.s32.totalorder 0, %s627
          %s632 = smul.addr %s625, 16
          %s633 = scalar_lea.hbm %s5, %s632
          %s634 = sshll.u32 [#allocation9], 4
          %s635 = int_to_ptr.vmem [resolvable:$true] %s634
          %s636 = sshll.u32 %s626, 4
          %640 = dma.vmem_to_hbm [thread:$0]  (%p631), %s635, %s636, %s633, [#allocation5], 16, 16, 1
        $region64: #{tpu_custom_call.1} parent=39 // pred_fallthru
          _
        // Predicated region
        $region65: #{tpu_custom_call.1} parent=39 // pred_check
          %p641 = pneg %p170
        $region66: #{tpu_custom_call.1} parent=39 // pred_check_branch
          %643 = sbr.rel (%p641) target = $region68
        $region67: #{tpu_custom_call.1} parent=39 // pred_region
          %644 = dma.done [#allocation5], 64
        $region68: #{tpu_custom_call.1} parent=39 // pred_fallthru
          _
      $region40: #{tpu_custom_call.1} parent=5 // pred_fallthru
        _
      %p645 = scmp.le.s32.totalorder 2, %s18
      // Predicated region
      $region69: #{tpu_custom_call.1} parent=5 // pred_check
        %p646 = pneg %p645
      $region70: #{tpu_custom_call.1} parent=5 // pred_check_branch
        %648 = sbr.rel (%p646) target = $region72
      $region71: #{tpu_custom_call.1} parent=5 // pred_region
        %s649 = ssub.s32 %s18, 2
      $region72: #{tpu_custom_call.1} parent=5 // pred_fallthru
        _
    $region6: #{tpu_custom_call.1} parent=1 // loop_footer
      %s22 = sadd.s32 1, %s18
    $region7: #{tpu_custom_call.1} parent=1 // loop_footer_branch
      %17 = sbr.rel target = $region3
    $region8: #{tpu_custom_call.1} parent=1 // loop_exit
      _
    %650 = vsyncpa [#allocation4], 1
    %s651 = scalar_lea.sflag [#allocation4], 1
    %652 = vsyncpa %s651, 1
    %653 = vsyncpa [#allocation7], 1
    %s654 = scalar_lea.sflag [#allocation7], 1
    %655 = vsyncpa %s654, 1
    %656 = vsyncpa [#allocation5], 1
    %s657 = scalar_lea.sflag [#allocation5], 1
    %658 = vsyncpa %s657, 1

// kernel: tpu_custom_call.1
$region0: #{tpu_custom_call.1}
  #allocation0 [shape = 'u32[]', space=smem, size = 0x4, offset = 0x4, fixed_abs, tag = 'smem constant byte address 0x4 - core index']
  #allocation1 [shape = 'u32[144,128]{1,0:T(1,128)}', space=vmem, size = 0x12000, scoped, tag = 'internal scratch']
  #allocation2 [shape = 'f32[8,128]{1,0:T(8,128)}', space=vmem, size = 0x1000, scoped, tag = 'scratch operand']
  %s0 = inlined_call_operand.hbm [shape: bf16[2,256], index: 0, kind: input, shape index: {}]
  %s1 = inlined_call_operand.hbm [shape: bf16[256,128], index: 1, kind: input, shape index: {}]
  %s2 = inlined_call_operand.vmem [shape: f32[1,128], index: 2, kind: input, shape index: {}]
  %s3 = inlined_call_operand.hbm [shape: bf16[128,128], index: 3, kind: input, shape index: {}]
  %s4 = inlined_call_operand.vmem [shape: f32[1,128], index: 4, kind: input, shape index: {}]
  %s5 = inlined_call_operand.hbm [shape: bf16[2,128], index: 5, kind: output, shape index: {}]
  %s6 = sld [smem:[#allocation0]]
  $region73: #{tpu_custom_call.1} parent=0
    _
  %s8 = ssub.s32 1, %s6
  %s9 = scalar_select 0, %s8, %s6
  $region1: #{tpu_custom_call.1} parent=0
    #allocation3 [shape = 'u8[4096]{0}', space=vmem, size = 0x1000, scoped, tag = 'input window, operand 0']
    #allocation4 [shape = 's32[2]{0}', space=sflag, size = 0x8, scoped, tag = 'scoped memory for tpu_custom_call.1']
    #allocation5 [shape = 's32[2]{0}', space=sflag, size = 0x8, scoped, tag = 'scoped memory for tpu_custom_call.1']
    #allocation6 [shape = 'u8[65536]{0}', space=vmem, size = 0x10000, scoped, tag = 'input window, operand 1']
    #allocation7 [shape = 's32[2]{0}', space=sflag, size = 0x8, scoped, tag = 'scoped memory for tpu_custom_call.1']
    #allocation8 [shape = 'u8[32768]{0}', space=vmem, size = 0x8000, scoped, tag = 'input window, operand 3, single buffered']
    #allocation9 [shape = 'u8[2048]{0}', space=vmem, size = 0x800, scoped, tag = 'output window, operand 0, single buffered']
    %10 = vsyncpa [#allocation4], 0
    %s11 = scalar_lea.sflag [#allocation4], 1
    %12 = vsyncpa %s11, 0
    %13 = vsyncpa [#allocation7], 0
    %s14 = scalar_lea.sflag [#allocation7], 1
    %15 = vsyncpa %s14, 0
    %16 = vsyncpa [#allocation5], 0
    loop: start=0, step=1, limit=4
    $region2: #{tpu_custom_call.1} parent=1 // loop_pre_header
      _
    $region3: #{tpu_custom_call.1} parent=1 // loop_header
      %s18 = sphi 0, %s22
      %p19 = scmp.ge.s32.totalorder %s18, 4
      %s25 = sphi 0, %s37
      %s26 = sphi 0, %s33
      %s27 = sphi 0, %s25
      %s28 = sphi 0, %s26
      %s29 = sphi 0, %s27
      %s30 = sphi 0, %s28
      %s42 = sphi 0, %s44
      %s45 = sphi 0, %s42
      %s46 = sphi 0, %s45
      %s62 = sphi 0, %s46
      %s68 = sphi 0, %s70
      %s71 = sphi 0, %s68
      %s72 = sphi 0, %s71
      %s88 = sphi 0, %s72
      %s92 = sphi 0, %s92
      %s94 = sphi 0, %s92
      %s95 = sphi 0, %s94
      %s109 = sphi 0, %s95
      %s113 = sphi 0, %s113
      %s115 = sphi 0, %s113
      %s116 = sphi 0, %s115
      %s130 = sphi 0, %s116
      %s134 = sphi 0, %s134
      %s136 = sphi 0, %s134
      %s137 = sphi 0, %s136
      %s151 = sphi 0, %s137
      %s157 = sphi 0, %s159
      %s160 = sphi 0, %s157
      %s161 = sphi 0, %s160
      %s177 = sphi 0, %s161
    $region4: #{tpu_custom_call.1} parent=1 // loop_header_branch
      %21 = sbr.rel (%p19) target = $region8
    $region5: #{tpu_custom_call.1} parent=1 // loop_body
      %s23 = ssub.s32 %s18, 1
      %s24 = ssub.s32 %s18, 2
      %s31 = sadd.s32 1, %s26
      %p32 = scmp.ge.s32.totalorder %s31, 2
      %s33 = scalar_select %p32, 0, %s31
      %s34 = sadd.s32 1, %s25
      %s35 = scalar_select %p32, %s34, %s25
      %p36 = scmp.ge.s32.totalorder %s35, 1
      %s37 = scalar_select %p36, 0, %s35
      %s38 = ssub.s32 %s25, %s37
      %s39 = ssub.s32 %s26, %s33
      %s40 = sor.u32 %s38, %s39
      %p41 = scmp.eq.s32.totalorder %s40, 0
      %s43 = sadd.s32 %s42, 1
      %s44 = scalar_select %p41, %s42, %s43
      %p47 = pneg %p41
      %p48 = scmp.eq.s32.totalorder %s18, 1
      %p49 = por %p47, %p48
      %p50 = scmp.ne.s32.totalorder %s42, %s45
      %p51 = scmp.eq.s32.totalorder %s18, 0
      %p52 = por %p50, %p51
      %p53 = scmp.ne.s32.totalorder %s42, %s45
      %p54 = scmp.eq.s32.totalorder %s23, 1
      %p55 = por %p53, %p54
      %p56 = scmp.ne.s32.totalorder %s45, %s46
      %p57 = scmp.eq.s32.totalorder %s23, 0
      %p58 = por %p56, %p57
      %p59 = scmp.ne.s32.totalorder %s45, %s46
      %p60 = scmp.eq.s32.totalorder %s24, 1
      %p61 = por %p59, %p60
      %p63 = scmp.ne.s32.totalorder %s46, %s62
      %p64 = scmp.eq.s32.totalorder %s24, 0
      %p65 = por %p63, %p64
      %s66 = ssub.s32 %s26, %s33
      %p67 = scmp.eq.s32.totalorder %s66, 0
      %s69 = sadd.s32 %s68, 1
      %s70 = scalar_select %p67, %s68, %s69
      %p73 = pneg %p67
      %p74 = scmp.eq.s32.totalorder %s18, 1
      %p75 = por %p73, %p74
      %p76 = scmp.ne.s32.totalorder %s68, %s71
      %p77 = scmp.eq.s32.totalorder %s18, 0
      %p78 = por %p76, %p77
      %p79 = scmp.ne.s32.totalorder %s68, %s71
      %p80 = scmp.eq.s32.totalorder %s23, 1
      %p81 = por %p79, %p80
      %p82 = scmp.ne.s32.totalorder %s71, %s72
      %p83 = scmp.eq.s32.totalorder %s23, 0
      %p84 = por %p82, %p83
      %p85 = scmp.ne.s32.totalorder %s71, %s72
      %p86 = scmp.eq.s32.totalorder %s24, 1
      %p87 = por %p85, %p86
      %p89 = scmp.ne.s32.totalorder %s72, %s88
      %p90 = scmp.eq.s32.totalorder %s24, 0
      %p91 = por %p89, %p90
      %s93 = sadd.s32 %s92, 1
      %p96 = scmp.eq.s32.totalorder %s18, 1
      %p97 = scmp.ne.s32.totalorder %s92, %s94
      %p98 = scmp.eq.s32.totalorder %s18, 0
      %p99 = por %p97, %p98
      %p100 = scmp.ne.s32.totalorder %s92, %s94
      %p101 = scmp.eq.s32.totalorder %s23, 1
      %p102 = por %p100, %p101
      %p103 = scmp.ne.s32.totalorder %s94, %s95
      %p104 = scmp.eq.s32.totalorder %s23, 0
      %p105 = por %p103, %p104
      %p106 = scmp.ne.s32.totalorder %s94, %s95
      %p107 = scmp.eq.s32.totalorder %s24, 1
      %p108 = por %p106, %p107
      %p110 = scmp.ne.s32.totalorder %s95, %s109
      %p111 = scmp.eq.s32.totalorder %s24, 0
      %p112 = por %p110, %p111
      %s114 = sadd.s32 %s113, 1
      %p117 = scmp.eq.s32.totalorder %s18, 1
      %p118 = scmp.ne.s32.totalorder %s113, %s115
      %p119 = scmp.eq.s32.totalorder %s18, 0
      %p120 = por %p118, %p119
      %p121 = scmp.ne.s32.totalorder %s113, %s115
      %p122 = scmp.eq.s32.totalorder %s23, 1
      %p123 = por %p121, %p122
      %p124 = scmp.ne.s32.totalorder %s115, %s116
      %p125 = scmp.eq.s32.totalorder %s23, 0
      %p126 = por %p124, %p125
      %p127 = scmp.ne.s32.totalorder %s115, %s116
      %p128 = scmp.eq.s32.totalorder %s24, 1
      %p129 = por %p127, %p128
      %p131 = scmp.ne.s32.totalorder %s116, %s130
      %p132 = scmp.eq.s32.totalorder %s24, 0
      %p133 = por %p131, %p132
      %s135 = sadd.s32 %s134, 1
      %p138 = scmp.eq.s32.totalorder %s18, 1
      %p139 = scmp.ne.s32.totalorder %s134, %s136
      %p140 = scmp.eq.s32.totalorder %s18, 0
      %p141 = por %p139, %p140
      %p142 = scmp.ne.s32.totalorder %s134, %s136
      %p143 = scmp.eq.s32.totalorder %s23, 1
      %p144 = por %p142, %p143
      %p145 = scmp.ne.s32.totalorder %s136, %s137
      %p146 = scmp.eq.s32.totalorder %s23, 0
      %p147 = por %p145, %p146
      %p148 = scmp.ne.s32.totalorder %s136, %s137
      %p149 = scmp.eq.s32.totalorder %s24, 1
      %p150 = por %p148, %p149
      %p152 = scmp.ne.s32.totalorder %s137, %s151
      %p153 = scmp.eq.s32.totalorder %s24, 0
      %p154 = por %p152, %p153
      %s155 = ssub.s32 %s25, %s37
      %p156 = scmp.eq.s32.totalorder %s155, 0
      %s158 = sadd.s32 %s157, 1
      %s159 = scalar_select %p156, %s157, %s158
      %p162 = pneg %p156
      %p163 = scmp.eq.s32.totalorder %s18, 1
      %p164 = por %p162, %p163
      %p165 = scmp.ne.s32.totalorder %s157, %s160
      %p166 = scmp.eq.s32.totalorder %s18, 0
      %p167 = por %p165, %p166
      %p168 = scmp.ne.s32.totalorder %s157, %s160
      %p169 = scmp.eq.s32.totalorder %s23, 1
      %p170 = por %p168, %p169
      %p171 = scmp.ne.s32.totalorder %s160, %s161
      %p172 = scmp.eq.s32.totalorder %s23, 0
      %p173 = por %p171, %p172
      %p174 = scmp.ne.s32.totalorder %s160, %s161
      %p175 = scmp.eq.s32.totalorder %s24, 1
      %p176 = por %p174, %p175
      %p178 = scmp.ne.s32.totalorder %s161, %s177
      %p179 = scmp.eq.s32.totalorder %s24, 0
      %p180 = por %p178, %p179
      %p181 = scmp.le.s32.totalorder 1, %s18
      %p182 = scmp.lt.s32.totalorder %s18, 3
      %p183 = pnand %p181, %p182
      %p184 = pneg %p183
      // Predicated region
      $region9: #{tpu_custom_call.1} parent=5 // pred_check
        _
      $region10: #{tpu_custom_call.1} parent=5 // pred_check_branch
        %186 = sbr.rel (%p183) target = $region12
      $region11: #{tpu_custom_call.1} parent=5 // pred_region
        %s187 = ssub.s32 %s18, 1
        // Predicated region
        $region13: #{tpu_custom_call.1} parent=11 // pred_check
          %p188 = pneg %p105
        $region14: #{tpu_custom_call.1} parent=11 // pred_check_branch
          %190 = sbr.rel (%p188) target = $region16
        $region15: #{tpu_custom_call.1} parent=11 // pred_region
          _
        $region16: #{tpu_custom_call.1} parent=11 // pred_fallthru
          _
        // Predicated region
        $region17: #{tpu_custom_call.1} parent=11 // pred_check
          %p191 = pneg %p126
        $region18: #{tpu_custom_call.1} parent=11 // pred_check_branch
          %193 = sbr.rel (%p191) target = $region20
        $region19: #{tpu_custom_call.1} parent=11 // pred_region
          %s195 = ssub.s32 1024, 1024
          %196 = vsyncadd [#allocation7], %s195
          %s197 = sshll.u32 [#allocation8], 4
          %s198 = int_to_ptr.vmem [resolvable:$true] %s197
          %203 = dma.hbm_to_vmem [thread:$0]  %s3, 1024, %s198, [#allocation7], 64, 64, 4
        $region20: #{tpu_custom_call.1} parent=11 // pred_fallthru
          _
        // Predicated region
        $region21: #{tpu_custom_call.1} parent=11 // pred_check
          %p204 = pneg %p147
        $region22: #{tpu_custom_call.1} parent=11 // pred_check_branch
          %206 = sbr.rel (%p204) target = $region24
        $region23: #{tpu_custom_call.1} parent=11 // pred_region
          _
        $region24: #{tpu_custom_call.1} parent=11 // pred_fallthru
          _
      $region12: #{tpu_custom_call.1} parent=5 // pred_fallthru
        _
      %p207 = scmp.lt.s32.totalorder %s18, 2
      // Predicated region
      $region25: #{tpu_custom_call.1} parent=5 // pred_check
        %p208 = pneg %p207
      $region26: #{tpu_custom_call.1} parent=5 // pred_check_branch
        %210 = sbr.rel (%p208) target = $region28
      $region27: #{tpu_custom_call.1} parent=5 // pred_region
        // Predicated region
        $region29: #{tpu_custom_call.1} parent=27 // pred_check
          %p211 = pneg %p52
        $region30: #{tpu_custom_call.1} parent=27 // pred_check_branch
          %213 = sbr.rel (%p211) target = $region32
        $region31: #{tpu_custom_call.1} parent=27 // pred_region
          %s214 = sand.u32 %s42, 1
          %s215 = scalar_lea.sflag [#allocation4], %s214
          %s216 = sand.u32 %s42, 1
          %s217 = smul.addr %s216, 4
          %s218 = scalar_lea.vmem [#allocation3], %s217
          %s219 = smul.u32 4, %s25
          %s220 = ssub.s32 1, %s219
          %s221 = smul.u32 16, %s220
          %s223 = ssub.s32 64, %s221
          %224 = vsyncadd %s215, %s223
          %p225 = scmp.ne.s32.totalorder 0, %s221
          %s226 = smul.addr %s219, 2
          %s227 = sadd.s32 %s26, %s226
          %s228 = smul.addr %s227, 16
          %s229 = scalar_lea.hbm %s0, %s228
          %s230 = sshll.u32 %s218, 4
          %s231 = int_to_ptr.vmem [resolvable:$true] %s230
          %s232 = sshll.u32 %s220, 4
          %236 = dma.hbm_to_vmem [thread:$0]  (%p225), %s229, %s232, %s231, %s215, 32, 16, 1
        $region32: #{tpu_custom_call.1} parent=27 // pred_fallthru
          _
        // Predicated region
        $region33: #{tpu_custom_call.1} parent=27 // pred_check
          %p237 = pneg %p78
        $region34: #{tpu_custom_call.1} parent=27 // pred_check_branch
          %239 = sbr.rel (%p237) target = $region36
        $region35: #{tpu_custom_call.1} parent=27 // pred_region
          %s240 = sand.u32 %s18, 1
          %s241 = scalar_lea.sflag [#allocation7], %s240
          %s242 = sand.u32 %s68, 1
          %s243 = smul.addr %s242, 64
          %s244 = scalar_lea.vmem [#allocation6], %s243
          %s245 = smul.u32 16, %s26
          %s247 = ssub.s32 1024, 1024
          %248 = vsyncadd %s241, %s247
          %s249 = smul.addr %s245, 64
          %s250 = scalar_lea.hbm %s1, %s249
          %s251 = sshll.u32 %s244, 4
          %s252 = int_to_ptr.vmem [resolvable:$true] %s251
          %257 = dma.hbm_to_vmem [thread:$0]  %s250, 1024, %s252, %s241, 64, 64, 4
        $region36: #{tpu_custom_call.1} parent=27 // pred_fallthru
          _
      $region28: #{tpu_custom_call.1} parent=5 // pred_fallthru
        _
      %p258 = scmp.le.s32.totalorder 1, %s18
      %p259 = scmp.lt.s32.totalorder %s18, 3
      %p260 = pnand %p258, %p259
      %p261 = pneg %p260
      // Predicated region
      $region37: #{tpu_custom_call.1} parent=5 // pred_check
        _
      $region38: #{tpu_custom_call.1} parent=5 // pred_check_branch
        %263 = sbr.rel (%p260) target = $region40
      $region39: #{tpu_custom_call.1} parent=5 // pred_region
        %s264 = ssub.s32 %s18, 1
        %s265 = sand.u32 %s45, 1
        %s266 = scalar_lea.sflag [#allocation4], %s265
        %s267 = sand.u32 %s45, 1
        %s268 = smul.addr %s267, 4
        %s269 = scalar_lea.vmem [#allocation3], %s268
        // Predicated region
        $region41: #{tpu_custom_call.1} parent=39 // pred_check
          %p270 = pneg %p58
        $region42: #{tpu_custom_call.1} parent=39 // pred_check_branch
          %272 = sbr.rel (%p270) target = $region44
        $region43: #{tpu_custom_call.1} parent=39 // pred_region
          %273 = dma.done %s266, 64
        $region44: #{tpu_custom_call.1} parent=39 // pred_fallthru
          _
        %s274 = sand.u32 %s23, 1
        %s275 = scalar_lea.sflag [#allocation7], %s274
        %s276 = sand.u32 %s71, 1
        %s277 = smul.addr %s276, 64
        %s278 = scalar_lea.vmem [#allocation6], %s277
        // Predicated region
        $region45: #{tpu_custom_call.1} parent=39 // pred_check
          %p279 = pneg %p84
        $region46: #{tpu_custom_call.1} parent=39 // pred_check_branch
          %281 = sbr.rel (%p279) target = $region48
        $region47: #{tpu_custom_call.1} parent=39 // pred_region
          %282 = dma.done %s275, 1024
        $region48: #{tpu_custom_call.1} parent=39 // pred_fallthru
          _
        // Predicated region
        $region49: #{tpu_custom_call.1} parent=39 // pred_check
          %p283 = pneg %p126
        $region50: #{tpu_custom_call.1} parent=39 // pred_check_branch
          %285 = sbr.rel (%p283) target = $region52
        $region51: #{tpu_custom_call.1} parent=39 // pred_region
          %286 = dma.done [#allocation7], 1024
        $region52: #{tpu_custom_call.1} parent=39 // pred_fallthru
          _
        %s287 = sand.u32 %s45, 1
        %s288 = scalar_lea.sflag [#allocation4], %s287
        %s289 = sand.u32 %s45, 1
        %s290 = smul.addr %s289, 4
        %s291 = scalar_lea.vmem [#allocation3], %s290
        %p292 = pneg %p58
        %p293 = pneg %p55
        %s294 = sand.u32 %s23, 1
        %s295 = scalar_lea.sflag [#allocation7], %s294
        %s296 = sand.u32 %s71, 1
        %s297 = smul.addr %s296, 64
        %s298 = scalar_lea.vmem [#allocation6], %s297
        %p299 = pneg %p84
        %p300 = pneg %p81
        %p301 = pneg %p105
        %p302 = pneg %p102
        %p303 = pneg %p126
        %p304 = pneg %p123
        %p305 = pneg %p147
        %p306 = pneg %p144
        %p307 = pneg %p173
        %p308 = pneg %p170
        %s309 = smul.u32 4, %s27
        %s310 = ssub.s32 1, %s309
        %s311 = smul.u32 16, %s310
        %s312 = smul.u32 16, %s28
        %s313 = smul.u32 4, %s27
        %s314 = ssub.s32 1, %s313
        %s315 = smul.u32 16, %s314
        %p317 = scmp.eq.s32.totalorder %s28, 0
        // Predicated region
        $region53: #{tpu_custom_call.1} parent=39 // pred_check
          %p318 = pneg %p317
        $region54: #{tpu_custom_call.1} parent=39 // pred_check_branch
          %320 = sbr.rel (%p318) target = $region56
        $region55: #{tpu_custom_call.1} parent=39 // pred_region
          %321 = vst [vmem:[#allocation2] sm:$0xff] 0.0
        $region56: #{tpu_custom_call.1} parent=39 // pred_fallthru
          _
        %v322 = vld [vmem:[#allocation2] sm:$0xff]
        %v323 = vld [vmem:[%s269] sm:$0x1]
        %v324 = vld [vmem:[%s269 + $0x1] sm:$0x1]
        %v325 = vld [vmem:[%s269 + $0x2] sm:$0x1]
        %v326 = vld [vmem:[%s269 + $0x3] sm:$0x1]
        %v327 = vld [vmem:[%s278] sm:$0xf]
        %v328 = vld [vmem:[%s278 + $0x4] sm:$0xf]
        %v329 = vld [vmem:[%s278 + $0x8] sm:$0xf]
        %v330 = vld [vmem:[%s278 + $0xc] sm:$0xf]
        %v331 = vld [vmem:[%s278 + $0x10] sm:$0xf]
        %v332 = vld [vmem:[%s278 + $0x14] sm:$0xf]
        %v333 = vld [vmem:[%s278 + $0x18] sm:$0xf]
        %v334 = vld [vmem:[%s278 + $0x1c] sm:$0xf]
        %v335 = vld [vmem:[%s278 + $0x20] sm:$0xf]
        %v336 = vld [vmem:[%s278 + $0x24] sm:$0xf]
        %v337 = vld [vmem:[%s278 + $0x28] sm:$0xf]
        %v338 = vld [vmem:[%s278 + $0x2c] sm:$0xf]
        %v339 = vld [vmem:[%s278 + $0x30] sm:$0xf]
        %v340 = vld [vmem:[%s278 + $0x34] sm:$0xf]
        %v341 = vld [vmem:[%s278 + $0x38] sm:$0xf]
        %v342 = vld [vmem:[%s278 + $0x3c] sm:$0xf]
        %v347 = vcombine.low %v323, %v324
        %v348 = vcombine.low %v325, %v326
        %v350 = vunpack.c.l.s4 1966171168
        %v351 = vunpack.c.0.s8 %v350
        %v352 = vlaneseq
        %v353 = vshrl.u32 %v352, 7
        %v354 = vsub.s32 %v351, %v353
        %v355 = vrot.slane %v347, %v354
        %v357 = vunpack.c.l.s4 1966171168
        %v358 = vunpack.c.0.s8 %v357
        %v359 = vlaneseq
        %v360 = vshrl.u32 %v359, 7
        %v361 = vsub.s32 %v358, %v360
        %v362 = vrot.slane %v348, %v361
        %v363 = vcombine.low %v355, %v362
        %v365 = vunpack.c.l.s4 1966171168
        %v366 = vunpack.c.0.s8 %v365
        %v367 = vlaneseq
        %v368 = vshrl.u32 %v367, 7
        %v369 = vsub.s32 %v366, %v368
        %v370 = vrot.slane %v363, %v369
        %v388 = vunpack.c.l.b16 %v327
        %v389 = vunpack.c.l.b16 %v328
        %v390 = vunpack.c.l.b16 %v329
        %v391 = vunpack.c.l.b16 %v330
        %v392 = vunpack.c.l.b16 %v331
        %v393 = vunpack.c.l.b16 %v332
        %v394 = vunpack.c.l.b16 %v333
        %v395 = vunpack.c.l.b16 %v334
        %v396 = vunpack.c.l.b16 %v335
        %v397 = vunpack.c.l.b16 %v336
        %v398 = vunpack.c.l.b16 %v337
        %v399 = vunpack.c.l.b16 %v338
        %v400 = vunpack.c.l.b16 %v339
        %v401 = vunpack.c.l.b16 %v340
        %v402 = vunpack.c.l.b16 %v341
        %v403 = vunpack.c.l.b16 %v342
        %v404 = vpack.c.b16 %v389, %v388
        %v405 = vpack.c.b16 %v391, %v390
        %v406 = vpack.c.b16 %v393, %v392
        %v407 = vpack.c.b16 %v395, %v394
        %v408 = vpack.c.b16 %v397, %v396
        %v409 = vpack.c.b16 %v399, %v398
        %v410 = vpack.c.b16 %v401, %v400
        %v411 = vpack.c.b16 %v403, %v402
        %420 = vmatprep.subr.bf16.mxu0 0
        %421 = vmatpush1.bf16.msra.mxu0 %v404
        %422 = vmatprep.subr.bf16.mxu0 0
        %423 = vmatpush1.bf16.msra.mxu0 %v405
        %424 = vmatprep.subr.bf16.mxu0 0
        %425 = vmatpush1.bf16.msra.mxu0 %v406
        %426 = vmatprep.subr.bf16.mxu0 0
        %427 = vmatpush1.bf16.msra.mxu0 %v407
        %428 = vmatprep.subr.bf16.mxu0 0
        %429 = vmatpush1.bf16.msra.mxu0 %v408
        %430 = vmatprep.subr.bf16.mxu0 0
        %431 = vmatpush1.bf16.msra.mxu0 %v409
        %432 = vmatprep.subr.bf16.mxu0 0
        %433 = vmatpush1.bf16.msra.mxu0 %v410
        %434 = vmatprep.subr.bf16.mxu0 0
        %435 = vmatpush1.bf16.msra.mxu0 %v411
        %436 = vmatprep.subr.bf16.mxu0 0
        %437 = vmatpush1.bf16.msra.mxu0 0
        %438 = vmatprep.subr.bf16.mxu0 0
        %439 = vmatpush1.bf16.msra.mxu0 0
        %440 = vmatprep.subr.bf16.mxu0 0
        %441 = vmatpush1.bf16.msra.mxu0 0
        %442 = vmatprep.subr.bf16.mxu0 0
        %443 = vmatpush1.bf16.msra.mxu0 0
        %444 = vmatprep.subr.bf16.mxu0 0
        %445 = vmatpush1.bf16.msra.mxu0 0
        %446 = vmatprep.subr.bf16.mxu0 0
        %447 = vmatpush1.bf16.msra.mxu0 0
        %448 = vmatprep.subr.bf16.mxu0 0
        %449 = vmatpush1.bf16.msra.mxu0 0
        %450 = vmatprep.subr.bf16.mxu0 0
        %451 = vmatpush1.bf16.msra.mxu0 0
        %452 = vmatprep.mubr.bf16.mxu0 0
        %453 = vmatmul.mubr.bf16.gmra.mrb[0].mxu0 %v370
        %v454 = vpop.f32.mrb[0].mxu0
        %v455 = vadd.f32 0.0, %v454
        %v456 = vpop.f32.mrb[0].mxu0
        %v457 = vpop.f32.mrb[0].mxu0
        %v458 = vpop.f32.mrb[0].mxu0
        %459 = vdwg.mxu0
        %v460 = vadd.f32 %v322, %v455
        %461 = vst [vmem:[#allocation2] sm:$0xff] %v460
        %p462 = scmp.eq.s32.totalorder %s28, 1
        // Predicated region
        $region57: #{tpu_custom_call.1} parent=39 // pred_check
          %p463 = pneg %p462
        $region58: #{tpu_custom_call.1} parent=39 // pred_check_branch
          %465 = sbr.rel (%p463) target = $region60
        $region59: #{tpu_custom_call.1} parent=39 // pred_region
          %v466 = vld [vmem:[#allocation2] sm:$0xff]
          %v467 = vld [vmem:[%s2] sm:$0x1]
          %v469 = vlaneseq
          %v470 = vshrl.u32 %v469, 7
          %v471 = vsub.s32 0, %v470
          %v472 = vrot.slane %v467, %v471
          %v474 = vadd.f32 %v466, %v472
          %v475 = vmax.f32 %v474, 0.0
          %v476 = vpack.c.bf16 %v475, %v475
          %v477 = vld [vmem:[#allocation8] sm:$0xf]
          %v478 = vld [vmem:[#allocation8 + $0x4] sm:$0xf]
          %v479 = vld [vmem:[#allocation8 + $0x8] sm:$0xf]
          %v480 = vld [vmem:[#allocation8 + $0xc] sm:$0xf]
          %v481 = vld [vmem:[#allocation8 + $0x10] sm:$0xf]
          %v482 = vld [vmem:[#allocation8 + $0x14] sm:$0xf]
          %v483 = vld [vmem:[#allocation8 + $0x18] sm:$0xf]
          %v484 = vld [vmem:[#allocation8 + $0x1c] sm:$0xf]
          %v485 = vld [vmem:[#allocation8 + $0x20] sm:$0xf]
          %v486 = vld [vmem:[#allocation8 + $0x24] sm:$0xf]
          %v487 = vld [vmem:[#allocation8 + $0x28] sm:$0xf]
          %v488 = vld [vmem:[#allocation8 + $0x2c] sm:$0xf]
          %v489 = vld [vmem:[#allocation8 + $0x30] sm:$0xf]
          %v490 = vld [vmem:[#allocation8 + $0x34] sm:$0xf]
          %v491 = vld [vmem:[#allocation8 + $0x38] sm:$0xf]
          %v492 = vld [vmem:[#allocation8 + $0x3c] sm:$0xf]
          %v493 = vld [vmem:[%s4] sm:$0x1]
          %v495 = vlaneseq
          %v496 = vshrl.u32 %v495, 7
          %v497 = vsub.s32 0, %v496
          %v498 = vrot.slane %v493, %v497
          %v516 = vunpack.c.l.b16 %v477
          %v517 = vunpack.c.l.b16 %v478
          %v518 = vunpack.c.l.b16 %v479
          %v519 = vunpack.c.l.b16 %v480
          %v520 = vunpack.c.l.b16 %v481
          %v521 = vunpack.c.l.b16 %v482
          %v522 = vunpack.c.l.b16 %v483
          %v523 = vunpack.c.l.b16 %v484
          %v524 = vunpack.c.l.b16 %v485
          %v525 = vunpack.c.l.b16 %v486
          %v526 = vunpack.c.l.b16 %v487
          %v527 = vunpack.c.l.b16 %v488
          %v528 = vunpack.c.l.b16 %v489
          %v529 = vunpack.c.l.b16 %v490
          %v530 = vunpack.c.l.b16 %v491
          %v531 = vunpack.c.l.b16 %v492
          %v532 = vpack.c.b16 %v517, %v516
          %v533 = vpack.c.b16 %v519, %v518
          %v534 = vpack.c.b16 %v521, %v520
          %v535 = vpack.c.b16 %v523, %v522
          %v536 = vpack.c.b16 %v525, %v524
          %v537 = vpack.c.b16 %v527, %v526
          %v538 = vpack.c.b16 %v529, %v528
          %v539 = vpack.c.b16 %v531, %v530
          %548 = vmatprep.subr.bf16.mxu0 0
          %549 = vmatpush1.bf16.msra.mxu0 %v532
          %550 = vmatprep.subr.bf16.mxu0 0
          %551 = vmatpush1.bf16.msra.mxu0 %v533
          %552 = vmatprep.subr.bf16.mxu0 0
          %553 = vmatpush1.bf16.msra.mxu0 %v534
          %554 = vmatprep.subr.bf16.mxu0 0
          %555 = vmatpush1.bf16.msra.mxu0 %v535
          %556 = vmatprep.subr.bf16.mxu0 0
          %557 = vmatpush1.bf16.msra.mxu0 %v536
          %558 = vmatprep.subr.bf16.mxu0 0
          %559 = vmatpush1.bf16.msra.mxu0 %v537
          %560 = vmatprep.subr.bf16.mxu0 0
          %561 = vmatpush1.bf16.msra.mxu0 %v538
          %562 = vmatprep.subr.bf16.mxu0 0
          %563 = vmatpush1.bf16.msra.mxu0 %v539
          %564 = vmatprep.subr.bf16.mxu0 0
          %565 = vmatpush1.bf16.msra.mxu0 0
          %566 = vmatprep.subr.bf16.mxu0 0
          %567 = vmatpush1.bf16.msra.mxu0 0
          %568 = vmatprep.subr.bf16.mxu0 0
          %569 = vmatpush1.bf16.msra.mxu0 0
          %570 = vmatprep.subr.bf16.mxu0 0
          %571 = vmatpush1.bf16.msra.mxu0 0
          %572 = vmatprep.subr.bf16.mxu0 0
          %573 = vmatpush1.bf16.msra.mxu0 0
          %574 = vmatprep.subr.bf16.mxu0 0
          %575 = vmatpush1.bf16.msra.mxu0 0
          %576 = vmatprep.subr.bf16.mxu0 0
          %577 = vmatpush1.bf16.msra.mxu0 0
          %578 = vmatprep.subr.bf16.mxu0 0
          %579 = vmatpush1.bf16.msra.mxu0 0
          %580 = vmatprep.mubr.bf16.mxu0 0
          %581 = vmatmul.mubr.bf16.gmra.mrb[0].mxu0 %v476
          %v582 = vpop.f32.mrb[0].mxu0
          %v583 = vadd.f32 %v498, %v582
          %v584 = vpop.f32.mrb[0].mxu0
          %v585 = vpop.f32.mrb[0].mxu0
          %v586 = vpop.f32.mrb[0].mxu0
          %587 = vdwg.mxu0
          %v588 = vpack.c.bf16 %v583, %v583
          %v591 = vunpack.c.l.s4 1966171168
          %v592 = vunpack.c.0.s8 %v591
          %v593 = vlaneseq
          %v594 = vshrl.u32 %v593, 7
          %v595 = vsub.s32 %v592, %v594
          %v596 = vrot.slane %v588, %v595
          %v597 = vcombine.high %v596, %v596
          %v599 = vunpack.c.l.s4 1966171168
          %v600 = vunpack.c.0.s8 %v599
          %v601 = vlaneseq
          %v602 = vshrl.u32 %v601, 7
          %v603 = vsub.s32 %v600, %v602
          %v604 = vrot.slane %v596, %v603
          %v606 = vunpack.c.l.s4 1966171168
          %v607 = vunpack.c.0.s8 %v606
          %v608 = vlaneseq
          %v609 = vshrl.u32 %v608, 7
          %v610 = vsub.s32 %v607, %v609
          %v611 = vrot.slane %v597, %v610
          %v612 = vcombine.high %v604, %v604
          %v613 = vcombine.high %v611, %v611
          %618 = vst [vmem:[#allocation9] sm:$0x1] %v604
          %619 = vst [vmem:[#allocation9 + $0x1] sm:$0x1] %v611
          %620 = vst [vmem:[#allocation9 + $0x2] sm:$0x1] %v612
          %621 = vst [vmem:[#allocation9 + $0x3] sm:$0x1] %v613
        $region60: #{tpu_custom_call.1} parent=39 // pred_fallthru
          _
        // Predicated region
        $region61: #{tpu_custom_call.1} parent=39 // pred_check
          %p622 = pneg %p170
        $region62: #{tpu_custom_call.1} parent=39 // pred_check_branch
          %624 = sbr.rel (%p622) target = $region64
        $region63: #{tpu_custom_call.1} parent=39 // pred_region
          %s625 = smul.u32 4, %s27
          %s626 = ssub.s32 1, %s625
          %s627 = smul.u32 16, %s626
          %s629 = ssub.s32 64, %s627
          %630 = vsyncadd [#allocation5], %s629
          %p631 = scmp.ne.s32.totalorder 0, %s627
          %s632 = smul.addr %s625, 16
          %s633 = scalar_lea.hbm %s5, %s632
          %s634 = sshll.u32 [#allocation9], 4
          %s635 = int_to_ptr.vmem [resolvable:$true] %s634
          %s636 = sshll.u32 %s626, 4
          %640 = dma.vmem_to_hbm [thread:$0]  (%p631), %s635, %s636, %s633, [#allocation5], 16, 16, 1
        $region64: #{tpu_custom_call.1} parent=39 // pred_fallthru
          _
        // Predicated region
        $region65: #{tpu_custom_call.1} parent=39 // pred_check
          %p641 = pneg %p170
        $region66: #{tpu_custom_call.1} parent=39 // pred_check_branch
          %643 = sbr.rel (%p641) target = $region68
        $region67: #{tpu_custom_call.1} parent=39 // pred_region
          %644 = dma.done [#allocation5], 64
        $region68: #{tpu_custom_call.1} parent=39 // pred_fallthru
          _
      $region40: #{tpu_custom_call.1} parent=5 // pred_fallthru
        _
      %p645 = scmp.le.s32.totalorder 2, %s18
      // Predicated region
      $region69: #{tpu_custom_call.1} parent=5 // pred_check
        %p646 = pneg %p645
      $region70: #{tpu_custom_call.1} parent=5 // pred_check_branch
        %648 = sbr.rel (%p646) target = $region72
      $region71: #{tpu_custom_call.1} parent=5 // pred_region
        %s649 = ssub.s32 %s18, 2
      $region72: #{tpu_custom_call.1} parent=5 // pred_fallthru
        _
    $region6: #{tpu_custom_call.1} parent=1 // loop_footer
      %s22 = sadd.s32 1, %s18
    $region7: #{tpu_custom_call.1} parent=1 // loop_footer_branch
      %17 = sbr.rel target = $region3
    $region8: #{tpu_custom_call.1} parent=1 // loop_exit
      _
    %650 = vsyncpa [#allocation4], 1
    %s651 = scalar_lea.sflag [#allocation4], 1
    %652 = vsyncpa %s651, 1
    %653 = vsyncpa [#allocation7], 1
    %s654 = scalar_lea.sflag [#allocation7], 1
    %655 = vsyncpa %s654, 1
    %656 = vsyncpa [#allocation5], 1
    %s657 = scalar_lea.sflag [#allocation5], 1
    %658 = vsyncpa %s657, 1

</llo_original>
